<compile_context>
chip_gen: v7x
topology: tpu7x:2x2x1
jax: 0.10.0
libtpu: 0.0.40
codegen_flags: <defaults>
</compile_context>

<pallas_src>
import functools

import jax
import jax.numpy as jnp
from jax.experimental import pallas as pl
from jax.experimental.pallas import tpu as pltpu


def ggnn_kernel(x_ref, adj_ref, w_ref, wrz_ref, wihn_ref, whhn_ref,
                brz_ref, bihn_ref, bhhn_ref, pool_ref, out_ref,
                x_state, xw_state):
    l = pl.program_id(0)              # layer axis (recurrent -> "arbitrary")
    i = pl.program_id(1)              # dst-row tile axis
    num_layers = pl.num_programs(0)
    TM = adj_ref.shape[0]
    Cp = xw_state.shape[1]

    # One-time init: persistent node state <- input features, pooled accum <- 0.
    @pl.when(jnp.logical_and(l == 0, i == 0))
    def _init():
        x_state[...] = x_ref[...]
        out_ref[...] = jnp.zeros_like(out_ref)

    # Once per layer: snapshot xw = x @ w[l] from the full pre-update state.
    # Shared by every dst-row tile of this layer (GGNN propagates simultaneously).
    @pl.when(i == 0)
    def _layer_setup():
        xw_state[...] = jnp.dot(
            x_state[...].astype(jnp.bfloat16), w_ref[0],
            preferred_element_type=jnp.float32).astype(jnp.bfloat16)

    row0 = pl.multiple_of(i * TM, TM)
    x_tile = x_state[pl.ds(row0, TM), :]                   # (TM, Cp) f32 hidden state
    xb = x_tile.astype(jnp.bfloat16)

    # Propagation for this dst-row tile: m = adj[rows, :] @ (x @ w[l]).
    m = jnp.dot(adj_ref[...], xw_state[...], preferred_element_type=jnp.float32)
    mb = m.astype(jnp.bfloat16)

    # Fused r/z gates: single K = 2*Cp matmul + one wide sigmoid (review #2).
    mx = jnp.concatenate([mb, xb], axis=1)                 # (TM, 2Cp)
    rz = jax.nn.sigmoid(
        jnp.dot(mx, wrz_ref[...], preferred_element_type=jnp.float32)
        + brz_ref[...])
    r = rz[:, :Cp]
    z = rz[:, Cp:]

    # n gate: n = tanh(gi_n + b_in + r * (gh_n + b_hn))  (input/hidden kept split).
    gi_n = jnp.dot(mb, wihn_ref[...], preferred_element_type=jnp.float32)
    gh_n = jnp.dot(xb, whhn_ref[...], preferred_element_type=jnp.float32)
    n = jnp.tanh(gi_n + bihn_ref[...] + r * (gh_n + bhhn_ref[...]))
    x_new = (1.0 - z) * n + z * x_tile

    # In-place state update: rows [row0, row0+TM) are never re-read this layer
    # (messages use the per-layer xw snapshot), so a single buffer is safe.
    x_state[pl.ds(row0, TM), :] = x_new

    # Final layer: leaky_relu + this tile's global_add_pool contribution.
    @pl.when(l == num_layers - 1)
    def _finalize():
        o = jnp.maximum(x_new, 0.01 * x_new).astype(jnp.bfloat16)   # leaky_relu
        out_ref[...] += jnp.dot(pool_ref[...], o,
                                preferred_element_type=jnp.float32)


def init_params(key, features, layers):
    """Random params matching torch GatedGraphConv/GRUCell shapes, padded + fused."""
    C = features
    Cp = max(128, ((C + 127) // 128) * 128)       # lane-aligned channel width
    k = jax.random.split(key, 5)
    scale = 1.0 / jnp.sqrt(C)
    w = jax.random.uniform(k[0], (layers, C, C), jnp.float32, -scale, scale)
    w_ih = jax.random.uniform(k[1], (3 * C, C), jnp.float32, -scale, scale)
    w_hh = jax.random.uniform(k[2], (3 * C, C), jnp.float32, -scale, scale)
    b_ih = jax.random.uniform(k[3], (3 * C,), jnp.float32, -scale, scale)
    b_hh = jax.random.uniform(k[4], (3 * C,), jnp.float32, -scale, scale)

    # Per-layer linear weight (applied as xw = x @ w[l]), zero-padded.
    w_pad = jnp.zeros((layers, Cp, Cp), jnp.float32).at[:, :C, :C].set(w)

    # torch GRUCell rows are [r; z; n] blocks of (3C, C), applied as gate = v @ W.T.
    def gate_block(wmat, g):                      # -> (Cp, Cp), transposed + padded
        return jnp.zeros((Cp, Cp), jnp.float32).at[:C, :C].set(
            wmat[g * C:(g + 1) * C, :].T)

    wih_r, wih_z, wih_n = (gate_block(w_ih, g) for g in range(3))
    whh_r, whh_z, whh_n = (gate_block(w_hh, g) for g in range(3))

    # Fused r/z weights for [m | x] @ W_rz (K = 2*Cp), columns [r | z].
    w_rz = jnp.concatenate(
        [jnp.concatenate([wih_r, wih_z], axis=1),
         jnp.concatenate([whh_r, whh_z], axis=1)], axis=0)          # (2Cp, 2Cp)

    def pad_bias(b):                              # (C,) -> (Cp,) zero padded
        return jnp.zeros((Cp,), jnp.float32).at[:C].set(b)

    b_rz = jnp.concatenate([pad_bias(b_ih[:C] + b_hh[:C]),
                            pad_bias(b_ih[C:2 * C] + b_hh[C:2 * C])]
                           ).reshape(1, 2 * Cp)
    bih_n = pad_bias(b_ih[2 * C:]).reshape(1, Cp)
    bhh_n = pad_bias(b_hh[2 * C:]).reshape(1, Cp)

    return dict(
        c_pad=Cp,
        w=w_pad.astype(jnp.bfloat16),
        w_rz=w_rz.astype(jnp.bfloat16),
        wih_n=wih_n.astype(jnp.bfloat16),
        whh_n=whh_n.astype(jnp.bfloat16),
        b_rz=b_rz, bih_n=bih_n, bhh_n=bhh_n,
        # raw (unpadded, torch-layout) copies for the f32 reference check
        raw=dict(w=w, w_ih=w_ih, w_hh=w_hh, b_ih=b_ih, b_hh=b_hh),
    )


def ggnn_forward(x, edge_index, edge_weight, batch, params, num_graphs, *,
                 tile_m=128):
    N, C = x.shape
    Cp = params["c_pad"]
    L = params["w"].shape[0]

    # ---- host-side glue (plain JAX): padding, scatter, one-hot pool ----------
    TM = tile_m
    Np = max(TM, ((N + TM - 1) // TM) * TM)       # full MXU M dimension (review #1)
    T = Np // TM
    Gp = ((num_graphs + 7) // 8) * 8              # sublane-aligned pooled output

    xp = jnp.zeros((Np, Cp), jnp.float32).at[:N, :C].set(x.astype(jnp.float32))

    # adj[dst, src] += edge_weight, built directly in bf16 (no extra cast pass).
    # TODO(synk): heavy-tailed degree sums may want an f32 build + single cast.
    src, dst = edge_index[0], edge_index[1]
    adj = jnp.zeros((Np, Np), jnp.bfloat16).at[dst, src].add(
        edge_weight.astype(jnp.bfloat16))

    # One-hot pooling matrix (Gp, Np); global_add_pool == pool @ o.
    pool = jnp.zeros((Gp, Np), jnp.bfloat16).at[:, :N].set(
        (batch[None, :] == jnp.arange(Gp, dtype=batch.dtype)[:, None]
         ).astype(jnp.bfloat16))

    # ---- cost / VMEM accounting (review #10) ---------------------------------
    flops = int(2 * L * (7 * Np * Cp * Cp + Np * Np * Cp) + 2 * Gp * Np * Cp)
    transcendentals = int(3 * L * Np * Cp)
    bytes_accessed = int(
        Np * Cp * 4 + L * Np * Np * 2 + L * Cp * Cp * 2
        + (2 * Cp) * (2 * Cp) * 2 + 2 * Cp * Cp * 2
        + (2 * Cp + 2 * Cp) * 4 + L * Gp * Np * 2 + Gp * Cp * 4)

    blk_bytes = (Np * Cp * 4                      # x (resident)
                 + 2 * TM * Np * 2                # adj row tile (double buffered)
                 + 2 * Cp * Cp * 2                # w[l]
                 + (2 * Cp) * (2 * Cp) * 2        # w_rz
                 + 2 * Cp * Cp * 2                # wih_n + whh_n
                 + 2 * Gp * TM * 2                # pool tile
                 + Gp * Cp * 4                    # out (resident)
                 + Np * Cp * 4 + Np * Cp * 2)     # scratch: x_state + xw
    vmem_limit = int(min(64 * 2**20, max(16 * 2**20, 2 * blk_bytes)))

    kernel = pl.pallas_call(
        ggnn_kernel,
        out_shape=jax.ShapeDtypeStruct((Gp, Cp), jnp.float32),
        grid_spec=pltpu.PrefetchScalarGridSpec(
            num_scalar_prefetch=0,
            grid=(L, T),
            in_specs=[
                pl.BlockSpec((Np, Cp), lambda l, i: (0, 0)),          # x (resident)
                pl.BlockSpec((TM, Np), lambda l, i: (i, 0)),          # adj row tiles
                pl.BlockSpec((1, Cp, Cp), lambda l, i: (l, 0, 0)),    # per-layer w
                pl.BlockSpec((2 * Cp, 2 * Cp), lambda l, i: (0, 0)),  # fused r/z W
                pl.BlockSpec((Cp, Cp), lambda l, i: (0, 0)),          # n-gate (in)
                pl.BlockSpec((Cp, Cp), lambda l, i: (0, 0)),          # n-gate (hid)
                pl.BlockSpec((1, 2 * Cp), lambda l, i: (0, 0)),       # b_rz
                pl.BlockSpec((1, Cp), lambda l, i: (0, 0)),           # bih_n
                pl.BlockSpec((1, Cp), lambda l, i: (0, 0)),           # bhh_n
                pl.BlockSpec((Gp, TM), lambda l, i: (0, i)),          # pool col tiles
            ],
            out_specs=pl.BlockSpec((Gp, Cp), lambda l, i: (0, 0)),
            scratch_shapes=[
                pltpu.VMEM((Np, Cp), jnp.float32),     # recurrent node state
                pltpu.VMEM((Np, Cp), jnp.bfloat16),    # per-layer x @ w[l] snapshot
            ],
        ),
        compiler_params=pltpu.CompilerParams(
            # Layer axis carries the GRU recurrence; the row-tile axis shares the
            # in-place x_state and per-layer xw snapshot, so both stay "arbitrary".
            # TODO(synk): per-core xw recompute would let the row-tile axis run
            # "parallel" across v7x's 2 TensorCores.
            dimension_semantics=("arbitrary", "arbitrary"),
            vmem_limit_bytes=vmem_limit,
        ),
        cost_estimate=pl.CostEstimate(
            flops=flops, transcendentals=transcendentals,
            bytes_accessed=bytes_accessed),
    )
    out_p = kernel(xp, adj, params["w"], params["w_rz"], params["wih_n"],
                   params["whh_n"], params["b_rz"], params["bih_n"],
                   params["bhh_n"], pool)
    return out_p[:num_graphs, :C]


def ggnn_reference(x, edge_index, edge_weight, batch, raw, num_graphs):
    """Pure-f32 JAX reference (mirrors GatedGraphConv + GRUCell + leaky_relu + pool)."""
    N, C = x.shape
    src, dst = edge_index[0], edge_index[1]
    adj = jnp.zeros((N, N), jnp.float32).at[dst, src].add(edge_weight)
    h = x.astype(jnp.float32)
    for layer in range(raw["w"].shape[0]):
        m = adj @ (h @ raw["w"][layer])
        gi = m @ raw["w_ih"].T + raw["b_ih"]
        gh = h @ raw["w_hh"].T + raw["b_hh"]
        r = jax.nn.sigmoid(gi[:, :C] + gh[:, :C])
        z = jax.nn.sigmoid(gi[:, C:2 * C] + gh[:, C:2 * C])
        n = jnp.tanh(gi[:, 2 * C:] + r * gh[:, 2 * C:])
        h = (1.0 - z) * n + z * h
    o = jnp.where(h > 0, h, 0.01 * h)
    pool = (batch[None, :] == jnp.arange(num_graphs)[:, None]).astype(jnp.float32)
    return pool @ o


if __name__ == "__main__":
    key = jax.random.PRNGKey(0)
    features_in = 32        # out_channels of GatedGraphConv (in == out here)
    layers = 3
    num_graphs = 8
    nodes_per_graph = 16
    num_nodes = num_graphs * nodes_per_graph      # 128 -> full MXU M dim (review #1)
    edges_per_graph = 40

    k_x, k_e, k_w, k_p = jax.random.split(key, 4)
    x = jax.random.normal(k_x, (num_nodes, features_in), jnp.float32)

    # Random edges within each graph (PyG-style block-diagonal batched graph).
    e = jax.random.randint(k_e, (2, num_graphs, edges_per_graph), 0,
                           nodes_per_graph, jnp.int32)
    offsets = (jnp.arange(num_graphs, dtype=jnp.int32) * nodes_per_graph
               )[None, :, None]
    edge_index = (e + offsets).reshape(2, num_graphs * edges_per_graph)
    edge_weight = jax.random.uniform(k_w, (num_graphs * edges_per_graph,),
                                     jnp.float32)
    batch = jnp.repeat(jnp.arange(num_graphs, dtype=jnp.int32), nodes_per_graph)

    params = init_params(k_p, features_in, layers)

    out = ggnn_forward(x, edge_index, edge_weight, batch, params, num_graphs)
    jax.block_until_ready(out)
    assert out.shape == (num_graphs, features_in)
    assert bool(jnp.all(jnp.isfinite(out)))

    # Tolerance check against the pure-f32 reference (bf16 MXU operands in-kernel).
    ref = ggnn_reference(x, edge_index, edge_weight, batch, params["raw"],
                         num_graphs)
    rel_err = float(jnp.linalg.norm(out - ref) / (jnp.linalg.norm(ref) + 1e-6))
    assert rel_err < 8e-2, f"mismatch vs f32 reference: rel_err={rel_err}"

    print("KERNEL_OK")
</pallas_src>

<mosaic_0001>
module attributes {stable_mosaic.version = 11 : i64} {
  func.func @ggnn_kernel(%arg0: i32, %arg1: i32, %arg2: memref<128x128xf32, #tpu.memory_space<vmem>>, %arg3: memref<128x128xbf16, #tpu.memory_space<vmem>>, %arg4: memref<1x128x128xbf16, #tpu.memory_space<vmem>>, %arg5: memref<256x256xbf16, #tpu.memory_space<vmem>>, %arg6: memref<128x128xbf16, #tpu.memory_space<vmem>>, %arg7: memref<128x128xbf16, #tpu.memory_space<vmem>>, %arg8: memref<1x256xf32, #tpu.memory_space<vmem>>, %arg9: memref<1x128xf32, #tpu.memory_space<vmem>>, %arg10: memref<1x128xf32, #tpu.memory_space<vmem>>, %arg11: memref<8x128xbf16, #tpu.memory_space<vmem>>, %arg12: memref<8x128xf32, #tpu.memory_space<vmem>>, %arg13: memref<128x128xf32, #tpu.memory_space<vmem>>, %arg14: memref<128x128xbf16, #tpu.memory_space<vmem>>) attributes {dimension_semantics = [#tpu.dimension_semantics<arbitrary>, #tpu.dimension_semantics<arbitrary>], iteration_bounds = array<i64: 3, 1>, scalar_prefetch = 0 : i64, scratch_operands = 2 : i64, tpu.core_type = #tpu.core_type<tc>, window_params = [{pipeline_mode = #tpu.pipeline_mode<synchronous>, transform_indices = @transform_0, window_bounds = array<i64: 128, 128>}, {transform_indices = @transform_1, window_bounds = array<i64: 128, 128>}, {transform_indices = @transform_2, window_bounds = array<i64: 1, 128, 128>}, {pipeline_mode = #tpu.pipeline_mode<synchronous>, transform_indices = @transform_3, window_bounds = array<i64: 256, 256>}, {pipeline_mode = #tpu.pipeline_mode<synchronous>, transform_indices = @transform_4, window_bounds = array<i64: 128, 128>}, {pipeline_mode = #tpu.pipeline_mode<synchronous>, transform_indices = @transform_5, window_bounds = array<i64: 128, 128>}, {pipeline_mode = #tpu.pipeline_mode<synchronous>, transform_indices = @transform_6, window_bounds = array<i64: 1, 256>}, {pipeline_mode = #tpu.pipeline_mode<synchronous>, transform_indices = @transform_7, window_bounds = array<i64: 1, 128>}, {pipeline_mode = #tpu.pipeline_mode<synchronous>, transform_indices = @transform_8, window_bounds = array<i64: 1, 128>}, {transform_indices = @transform_9, window_bounds = array<i64: 8, 128>}, {pipeline_mode = #tpu.pipeline_mode<synchronous>, transform_indices = @transform_10, window_bounds = array<i64: 8, 128>}]} {
    %c0_i32 = arith.constant 0 : i32
    %0 = arith.cmpi eq, %arg0, %c0_i32 : i32
    %c0_i32_0 = arith.constant 0 : i32
    %1 = arith.cmpi eq, %arg1, %c0_i32_0 : i32
    %2 = arith.andi %0, %1 : i1
    %3 = arith.extui %2 : i1 to i32
    %c0_i32_1 = arith.constant 0 : i32
    %4 = arith.cmpi ne, %3, %c0_i32_1 : i32
    scf.if %4 {
      %c0_27 = arith.constant 0 : index
      %c0_28 = arith.constant 0 : index
      %53 = vector.load %arg2[%c0_27, %c0_28] : memref<128x128xf32, #tpu.memory_space<vmem>>, vector<128x128xf32>
      %c0_29 = arith.constant 0 : index
      %c0_30 = arith.constant 0 : index
      %54 = vector.load %arg13[%c0_29, %c0_30] : memref<128x128xf32, #tpu.memory_space<vmem>>, vector<128x128xf32>
      tpu.vector_store %arg13[%c0_29, %c0_30], %53 {strides = array<i32>} : memref<128x128xf32, #tpu.memory_space<vmem>>, vector<128x128xf32>,
      %cst_31 = arith.constant 0.000000e+00 : f32
      %55 = vector.broadcast %cst_31 : f32 to vector<8x128xf32>
      %c0_32 = arith.constant 0 : index
      %c0_33 = arith.constant 0 : index
      %56 = vector.load %arg12[%c0_32, %c0_33] : memref<8x128xf32, #tpu.memory_space<vmem>>, vector<8x128xf32>
      tpu.vector_store %arg12[%c0_32, %c0_33], %55 {strides = array<i32>} : memref<8x128xf32, #tpu.memory_space<vmem>>, vector<8x128xf32>,
    } else {
    }
    %c0_i32_2 = arith.constant 0 : i32
    %5 = arith.cmpi eq, %arg1, %c0_i32_2 : i32
    %6 = arith.extui %5 : i1 to i32
    %c0_i32_3 = arith.constant 0 : i32
    %7 = arith.cmpi ne, %6, %c0_i32_3 : i32
    scf.if %7 {
      %c0_27 = arith.constant 0 : index
      %c0_28 = arith.constant 0 : index
      %53 = vector.load %arg13[%c0_27, %c0_28] : memref<128x128xf32, #tpu.memory_space<vmem>>, vector<128x128xf32>
      %54 = arith.truncf %53 : vector<128x128xf32> to vector<128x128xbf16>
      %c0_29 = arith.constant 0 : index
      %c0_30 = arith.constant 0 : index
      %c0_31 = arith.constant 0 : index
      %55 = vector.load %arg4[%c0_29, %c0_30, %c0_31] : memref<1x128x128xbf16, #tpu.memory_space<vmem>>, vector<1x128x128xbf16>
      %56 = vector.shape_cast %55 : vector<1x128x128xbf16> to vector<128x128xbf16>
      %cst_32 = arith.constant dense<0.000000e+00> : vector<128x128xf32>
      %57 = tpu.matmul %54, %56, %cst_32 {dimension_numbers = #tpu.dot_dimension_numbers<[1], [0], [0], [1], [0, 0, 1, 1], [], []>} : vector<128x128xbf16>, vector<128x128xbf16>, vector<128x128xf32> -> vector<128x128xf32>
      %58 = arith.truncf %57 : vector<128x128xf32> to vector<128x128xbf16>
      %c0_33 = arith.constant 0 : index
      %c0_34 = arith.constant 0 : index
      %59 = vector.load %arg14[%c0_33, %c0_34] : memref<128x128xbf16, #tpu.memory_space<vmem>>, vector<128x128xbf16>
      tpu.vector_store %arg14[%c0_33, %c0_34], %58 {strides = array<i32>} : memref<128x128xbf16, #tpu.memory_space<vmem>>, vector<128x128xbf16>,
    } else {
    }
    %c128_i32 = arith.constant 128 : i32
    %8 = arith.muli %arg1, %c128_i32 : i32
    %9 = tpu.assume_multiple %8, 128 : i32
    %10 = arith.index_cast %9 : i32 to index
    %c0 = arith.constant 0 : index
    %11 = vector.load %arg13[%10, %c0] : memref<128x128xf32, #tpu.memory_space<vmem>>, vector<128x128xf32>
    %12 = arith.truncf %11 : vector<128x128xf32> to vector<128x128xbf16>
    %c0_4 = arith.constant 0 : index
    %c0_5 = arith.constant 0 : index
    %13 = vector.load %arg3[%c0_4, %c0_5] : memref<128x128xbf16, #tpu.memory_space<vmem>>, vector<128x128xbf16>
    %c0_6 = arith.constant 0 : index
    %c0_7 = arith.constant 0 : index
    %14 = vector.load %arg14[%c0_6, %c0_7] : memref<128x128xbf16, #tpu.memory_space<vmem>>, vector<128x128xbf16>
    %cst = arith.constant dense<0.000000e+00> : vector<128x128xf32>
    %15 = tpu.matmul %13, %14, %cst {dimension_numbers = #tpu.dot_dimension_numbers<[1], [0], [0], [1], [0, 0, 1, 1], [], []>} : vector<128x128xbf16>, vector<128x128xbf16>, vector<128x128xf32> -> vector<128x128xf32>
    %16 = arith.truncf %15 : vector<128x128xf32> to vector<128x128xbf16>
    %17 = tpu.concatenate %16, %12 in 1 : vector<128x128xbf16>, vector<128x128xbf16> -> vector<128x256xbf16>
    %c0_8 = arith.constant 0 : index
    %c0_9 = arith.constant 0 : index
    %18 = vector.load %arg5[%c0_8, %c0_9] : memref<256x256xbf16, #tpu.memory_space<vmem>>, vector<256x256xbf16>
    %cst_10 = arith.constant dense<0.000000e+00> : vector<128x256xf32>
    %19 = tpu.matmul %17, %18, %cst_10 {dimension_numbers = #tpu.dot_dimension_numbers<[1], [0], [0], [1], [0, 0, 1, 1], [], []>} : vector<128x256xbf16>, vector<256x256xbf16>, vector<128x256xf32> -> vector<128x256xf32>
    %c0_11 = arith.constant 0 : index
    %c0_12 = arith.constant 0 : index
    %20 = vector.load %arg8[%c0_11, %c0_12] : memref<1x256xf32, #tpu.memory_space<vmem>>, vector<1x256xf32>
    %21 = vector.broadcast %20 : vector<1x256xf32> to vector<128x256xf32>
    %22 = arith.addf %19, %21 : vector<128x256xf32>
    %23 = arith.negf %22 : vector<128x256xf32>
    %24 = math.exp %23 : vector<128x256xf32>
    %cst_13 = arith.constant 1.000000e+00 : f32
    %25 = vector.broadcast %cst_13 : f32 to vector<128x256xf32>
    %26 = arith.addf %25, %24 : vector<128x256xf32>
    %27 = arith.divf %25, %26 : vector<128x256xf32>
    %28 = vector.extract_strided_slice %27 {offsets = [0, 0], sizes = [128, 128], strides = [1, 1]} : vector<128x256xf32> to vector<128x128xf32>
    %29 = vector.extract_strided_slice %27 {offsets = [0, 128], sizes = [128, 128], strides = [1, 1]} : vector<128x256xf32> to vector<128x128xf32>
    %c0_14 = arith.constant 0 : index
    %c0_15 = arith.constant 0 : index
    %30 = vector.load %arg6[%c0_14, %c0_15] : memref<128x128xbf16, #tpu.memory_space<vmem>>, vector<128x128xbf16>
    %cst_16 = arith.constant dense<0.000000e+00> : vector<128x128xf32>
    %31 = tpu.matmul %16, %30, %cst_16 {dimension_numbers = #tpu.dot_dimension_numbers<[1], [0], [0], [1], [0, 0, 1, 1], [], []>} : vector<128x128xbf16>, vector<128x128xbf16>, vector<128x128xf32> -> vector<128x128xf32>
    %c0_17 = arith.constant 0 : index
    %c0_18 = arith.constant 0 : index
    %32 = vector.load %arg7[%c0_17, %c0_18] : memref<128x128xbf16, #tpu.memory_space<vmem>>, vector<128x128xbf16>
    %cst_19 = arith.constant dense<0.000000e+00> : vector<128x128xf32>
    %33 = tpu.matmul %12, %32, %cst_19 {dimension_numbers = #tpu.dot_dimension_numbers<[1], [0], [0], [1], [0, 0, 1, 1], [], []>} : vector<128x128xbf16>, vector<128x128xbf16>, vector<128x128xf32> -> vector<128x128xf32>
    %c0_20 = arith.constant 0 : index
    %c0_21 = arith.constant 0 : index
    %34 = vector.load %arg9[%c0_20, %c0_21] : memref<1x128xf32, #tpu.memory_space<vmem>>, vector<1x128xf32>
    %35 = vector.broadcast %34 : vector<1x128xf32> to vector<128x128xf32>
    %36 = arith.addf %31, %35 : vector<128x128xf32>
    %c0_22 = arith.constant 0 : index
    %c0_23 = arith.constant 0 : index
    %37 = vector.load %arg10[%c0_22, %c0_23] : memref<1x128xf32, #tpu.memory_space<vmem>>, vector<1x128xf32>
    %38 = vector.broadcast %37 : vector<1x128xf32> to vector<128x128xf32>
    %39 = arith.addf %33, %38 : vector<128x128xf32>
    %40 = arith.mulf %28, %39 : vector<128x128xf32>
    %41 = arith.addf %36, %40 : vector<128x128xf32>
    %42 = math.tanh %41 : vector<128x128xf32>
    %cst_24 = arith.constant 1.000000e+00 : f32
    %43 = vector.broadcast %cst_24 : f32 to vector<128x128xf32>
    %44 = arith.subf %43, %29 : vector<128x128xf32>
    %45 = arith.mulf %44, %42 : vector<128x128xf32>
    %46 = arith.mulf %29, %11 : vector<128x128xf32>
    %47 = arith.addf %45, %46 : vector<128x128xf32>
    %48 = arith.index_cast %9 : i32 to index
    %c0_25 = arith.constant 0 : index
    %49 = vector.load %arg13[%48, %c0_25] : memref<128x128xf32, #tpu.memory_space<vmem>>, vector<128x128xf32>
    tpu.vector_store %arg13[%48, %c0_25], %47 {strides = array<i32>} : memref<128x128xf32, #tpu.memory_space<vmem>>, vector<128x128xf32>,
    %c2_i32 = arith.constant 2 : i32
    %50 = arith.cmpi eq, %arg0, %c2_i32 : i32
    %51 = arith.extui %50 : i1 to i32
    %c0_i32_26 = arith.constant 0 : i32
    %52 = arith.cmpi ne, %51, %c0_i32_26 : i32
    scf.if %52 {
      %cst_27 = arith.constant 0.00999999977 : f32
      %53 = vector.broadcast %cst_27 : f32 to vector<128x128xf32>
      %54 = arith.mulf %53, %47 : vector<128x128xf32>
      %55 = arith.maximumf %47, %54 : vector<128x128xf32>
      %56 = arith.truncf %55 : vector<128x128xf32> to vector<128x128xbf16>
      %c0_28 = arith.constant 0 : index
      %c0_29 = arith.constant 0 : index
      %57 = vector.load %arg12[%c0_28, %c0_29] : memref<8x128xf32, #tpu.memory_space<vmem>>, vector<8x128xf32>
      %c0_30 = arith.constant 0 : index
      %c0_31 = arith.constant 0 : index
      %58 = vector.load %arg11[%c0_30, %c0_31] : memref<8x128xbf16, #tpu.memory_space<vmem>>, vector<8x128xbf16>
      %cst_32 = arith.constant dense<0.000000e+00> : vector<8x128xf32>
      %59 = tpu.matmul %58, %56, %cst_32 {dimension_numbers = #tpu.dot_dimension_numbers<[1], [0], [0], [1], [0, 0, 1, 1], [], []>} : vector<8x128xbf16>, vector<128x128xbf16>, vector<8x128xf32> -> vector<8x128xf32>
      %60 = arith.addf %57, %59 : vector<8x128xf32>
      %c0_33 = arith.constant 0 : index
      %c0_34 = arith.constant 0 : index
      %61 = vector.load %arg12[%c0_33, %c0_34] : memref<8x128xf32, #tpu.memory_space<vmem>>, vector<8x128xf32>
      tpu.vector_store %arg12[%c0_33, %c0_34], %60 {strides = array<i32>} : memref<8x128xf32, #tpu.memory_space<vmem>>, vector<8x128xf32>,
    } else {
    }
    return
  }
  func.func @transform_0(%arg0: i32, %arg1: i32) -> (i32, i32) {
    %c0_i32 = arith.constant 0 : i32
    %c0_i32_0 = arith.constant 0 : i32
    %c0_i32_1 = arith.constant 0 : i32
    return %c0_i32, %c0_i32_0 : i32, i32
  }
  func.func @transform_1(%arg0: i32, %arg1: i32) -> (i32, i32) {
    %c0_i32 = arith.constant 0 : i32
    %c0_i32_0 = arith.constant 0 : i32
    return %arg1, %c0_i32 : i32, i32
  }
  func.func @transform_2(%arg0: i32, %arg1: i32) -> (i32, i32, i32) {
    %c0_i32 = arith.constant 0 : i32
    %c0_i32_0 = arith.constant 0 : i32
    %c0_i32_1 = arith.constant 0 : i32
    return %arg0, %c0_i32, %c0_i32_0 : i32, i32, i32
  }
  func.func @transform_3(%arg0: i32, %arg1: i32) -> (i32, i32) {
    %c0_i32 = arith.constant 0 : i32
    %c0_i32_0 = arith.constant 0 : i32
    %c0_i32_1 = arith.constant 0 : i32
    return %c0_i32, %c0_i32_0 : i32, i32
  }
  func.func @transform_4(%arg0: i32, %arg1: i32) -> (i32, i32) {
    %c0_i32 = arith.constant 0 : i32
    %c0_i32_0 = arith.constant 0 : i32
    %c0_i32_1 = arith.constant 0 : i32
    return %c0_i32, %c0_i32_0 : i32, i32
  }
  func.func @transform_5(%arg0: i32, %arg1: i32) -> (i32, i32) {
    %c0_i32 = arith.constant 0 : i32
    %c0_i32_0 = arith.constant 0 : i32
    %c0_i32_1 = arith.constant 0 : i32
    return %c0_i32, %c0_i32_0 : i32, i32
  }
  func.func @transform_6(%arg0: i32, %arg1: i32) -> (i32, i32) {
    %c0_i32 = arith.constant 0 : i32
    %c0_i32_0 = arith.constant 0 : i32
    %c0_i32_1 = arith.constant 0 : i32
    return %c0_i32, %c0_i32_0 : i32, i32
  }
  func.func @transform_7(%arg0: i32, %arg1: i32) -> (i32, i32) {
    %c0_i32 = arith.constant 0 : i32
    %c0_i32_0 = arith.constant 0 : i32
    %c0_i32_1 = arith.constant 0 : i32
    return %c0_i32, %c0_i32_0 : i32, i32
  }
  func.func @transform_8(%arg0: i32, %arg1: i32) -> (i32, i32) {
    %c0_i32 = arith.constant 0 : i32
    %c0_i32_0 = arith.constant 0 : i32
    %c0_i32_1 = arith.constant 0 : i32
    return %c0_i32, %c0_i32_0 : i32, i32
  }
  func.func @transform_9(%arg0: i32, %arg1: i32) -> (i32, i32) {
    %c0_i32 = arith.constant 0 : i32
    %c0_i32_0 = arith.constant 0 : i32
    return %c0_i32, %arg1 : i32, i32
  }
  func.func @transform_10(%arg0: i32, %arg1: i32) -> (i32, i32) {
    %c0_i32 = arith.constant 0 : i32
    %c0_i32_0 = arith.constant 0 : i32
    %c0_i32_1 = arith.constant 0 : i32
    return %c0_i32, %c0_i32_0 : i32, i32
  }
}

</mosaic_0001>

<llo_original>
// kernel: tpu_custom_call.1
$region0: #{tpu_custom_call.1}
  #allocation0 [shape = 'u32[]', space=smem, size = 0x4, offset = 0x4, fixed_abs, tag = 'smem constant byte address 0x4 - core index']
  #allocation1 [shape = 'u32[144,128]{1,0:T(1,128)}', space=vmem, size = 0x12000, scoped, tag = 'internal scratch']
  #allocation2 [shape = 'f32[128,128]{1,0:T(8,128)}', space=vmem, size = 0x10000, scoped, tag = 'scratch operand']
  #allocation3 [shape = 'bf16[128,128]{1,0:T(16,128)(2,1)}', space=vmem, size = 0x8000, scoped, tag = 'scratch operand']
  %s0 = inlined_call_operand.hbm [shape: f32[128,128], index: 0, kind: input, shape index: {}]
  %s1 = inlined_call_operand.hbm [shape: bf16[128,128], index: 1, kind: input, shape index: {}]
  %s2 = inlined_call_operand.hbm [shape: bf16[3,128,128], index: 2, kind: input, shape index: {}]
  %s3 = inlined_call_operand.hbm [shape: bf16[256,256], index: 3, kind: input, shape index: {}]
  %s4 = inlined_call_operand.hbm [shape: bf16[128,128], index: 4, kind: input, shape index: {}]
  %s5 = inlined_call_operand.hbm [shape: bf16[128,128], index: 5, kind: input, shape index: {}]
  %s6 = inlined_call_operand.vmem [shape: f32[1,256], index: 6, kind: input, shape index: {}]
  %s7 = inlined_call_operand.vmem [shape: f32[1,128], index: 7, kind: input, shape index: {}]
  %s8 = inlined_call_operand.vmem [shape: f32[1,128], index: 8, kind: input, shape index: {}]
  %s9 = inlined_call_operand.vmem [shape: bf16[8,128], index: 9, kind: input, shape index: {}]
  %s10 = inlined_call_operand.hbm [shape: f32[8,128], index: 10, kind: output, shape index: {}]
  %s11 = sld [smem:[#allocation0]]
  $region109: #{tpu_custom_call.1} parent=0
    _
  %s13 = ssub.s32 1, %s11
  %s14 = scalar_select 0, %s13, %s11
  $region1: #{tpu_custom_call.1} parent=0
    #allocation4 [shape = 'u8[65536]{0}', space=vmem, size = 0x10000, scoped, tag = 'input window, operand 0, single buffered']
    #allocation5 [shape = 's32[2]{0}', space=sflag, size = 0x8, scoped, tag = 'scoped memory for tpu_custom_call.1']
    #allocation6 [shape = 's32[2]{0}', space=sflag, size = 0x8, scoped, tag = 'scoped memory for tpu_custom_call.1']
    #allocation7 [shape = 'u8[32768]{0}', space=vmem, size = 0x8000, scoped, tag = 'input window, operand 1, single buffered']
    #allocation8 [shape = 's32[1]{0}', space=sflag, size = 0x4, scoped, tag = 'scoped memory for tpu_custom_call.1']
    #allocation9 [shape = 'u8[65536]{0}', space=vmem, size = 0x10000, scoped, tag = 'input window, operand 2']
    #allocation10 [shape = 'u8[131072]{0}', space=vmem, size = 0x20000, scoped, tag = 'input window, operand 3, single buffered']
    #allocation11 [shape = 'u8[32768]{0}', space=vmem, size = 0x8000, scoped, tag = 'input window, operand 4, single buffered']
    #allocation12 [shape = 's32[1]{0}', space=sflag, size = 0x4, scoped, tag = 'scoped memory for tpu_custom_call.1']
    #allocation13 [shape = 'u8[32768]{0}', space=vmem, size = 0x8000, scoped, tag = 'input window, operand 5, single buffered']
    #allocation14 [shape = 'u8[4096]{0}', space=vmem, size = 0x1000, scoped, tag = 'output window, operand 0, single buffered']
    %15 = vsyncpa [#allocation5], 0
    %16 = vsyncpa [#allocation8], 0
    %17 = vsyncpa [#allocation12], 0
    %18 = vsyncpa [#allocation6], 0
    loop: start=0, step=1, limit=5
    $region2: #{tpu_custom_call.1} parent=1 // loop_pre_header
      _
    $region3: #{tpu_custom_call.1} parent=1 // loop_header
      %s20 = sphi 0, %s24
      %p21 = scmp.ge.s32.totalorder %s20, 5
      %s27 = sphi 0, %s39
      %s28 = sphi 0, %s35
      %s29 = sphi 0, %s27
      %s30 = sphi 0, %s28
      %s31 = sphi 0, %s29
      %s32 = sphi 0, %s30
      %s40 = sphi 0, %s40
      %s42 = sphi 0, %s40
      %s43 = sphi 0, %s42
      %s57 = sphi 0, %s43
      %s63 = sphi 0, %s65
      %s66 = sphi 0, %s63
      %s67 = sphi 0, %s66
      %s83 = sphi 0, %s67
      %s89 = sphi 0, %s91
      %s92 = sphi 0, %s89
      %s93 = sphi 0, %s92
      %s109 = sphi 0, %s93
      %s113 = sphi 0, %s113
      %s115 = sphi 0, %s113
      %s116 = sphi 0, %s115
      %s130 = sphi 0, %s116
      %s134 = sphi 0, %s134
      %s136 = sphi 0, %s134
      %s137 = sphi 0, %s136
      %s151 = sphi 0, %s137
      %s155 = sphi 0, %s155
      %s157 = sphi 0, %s155
      %s158 = sphi 0, %s157
      %s172 = sphi 0, %s158
      %s176 = sphi 0, %s176
      %s178 = sphi 0, %s176
      %s179 = sphi 0, %s178
      %s193 = sphi 0, %s179
      %s197 = sphi 0, %s197
      %s199 = sphi 0, %s197
      %s200 = sphi 0, %s199
      %s214 = sphi 0, %s200
      %s218 = sphi 0, %s218
      %s220 = sphi 0, %s218
      %s221 = sphi 0, %s220
      %s235 = sphi 0, %s221
      %s241 = sphi 0, %s243
      %s244 = sphi 0, %s241
      %s245 = sphi 0, %s244
      %s261 = sphi 0, %s245
      %s265 = sphi 0, %s265
      %s267 = sphi 0, %s265
      %s268 = sphi 0, %s267
      %s282 = sphi 0, %s268
    $region4: #{tpu_custom_call.1} parent=1 // loop_header_branch
      %23 = sbr.rel (%p21) target = $region8
    $region5: #{tpu_custom_call.1} parent=1 // loop_body
      %s25 = ssub.s32 %s20, 1
      %s26 = ssub.s32 %s20, 2
      %s33 = sadd.s32 1, %s28
      %p34 = scmp.ge.s32.totalorder %s33, 1
      %s35 = scalar_select %p34, 0, %s33
      %s36 = sadd.s32 1, %s27
      %s37 = scalar_select %p34, %s36, %s27
      %p38 = scmp.ge.s32.totalorder %s37, 3
      %s39 = scalar_select %p38, 0, %s37
      %s41 = sadd.s32 %s40, 1
      %p44 = scmp.eq.s32.totalorder %s20, 2
      %p45 = scmp.ne.s32.totalorder %s40, %s42
      %p46 = scmp.eq.s32.totalorder %s20, 0
      %p47 = por %p45, %p46
      %p48 = scmp.ne.s32.totalorder %s40, %s42
      %p49 = scmp.eq.s32.totalorder %s25, 2
      %p50 = por %p48, %p49
      %p51 = scmp.ne.s32.totalorder %s42, %s43
      %p52 = scmp.eq.s32.totalorder %s25, 0
      %p53 = por %p51, %p52
      %p54 = scmp.ne.s32.totalorder %s42, %s43
      %p55 = scmp.eq.s32.totalorder %s26, 2
      %p56 = por %p54, %p55
      %p58 = scmp.ne.s32.totalorder %s43, %s57
      %p59 = scmp.eq.s32.totalorder %s26, 0
      %p60 = por %p58, %p59
      %s61 = ssub.s32 %s28, %s35
      %p62 = scmp.eq.s32.totalorder %s61, 0
      %s64 = sadd.s32 %s63, 1
      %s65 = scalar_select %p62, %s63, %s64
      %p68 = pneg %p62
      %p69 = scmp.eq.s32.totalorder %s20, 2
      %p70 = por %p68, %p69
      %p71 = scmp.ne.s32.totalorder %s63, %s66
      %p72 = scmp.eq.s32.totalorder %s20, 0
      %p73 = por %p71, %p72
      %p74 = scmp.ne.s32.totalorder %s63, %s66
      %p75 = scmp.eq.s32.totalorder %s25, 2
      %p76 = por %p74, %p75
      %p77 = scmp.ne.s32.totalorder %s66, %s67
      %p78 = scmp.eq.s32.totalorder %s25, 0
      %p79 = por %p77, %p78
      %p80 = scmp.ne.s32.totalorder %s66, %s67
      %p81 = scmp.eq.s32.totalorder %s26, 2
      %p82 = por %p80, %p81
      %p84 = scmp.ne.s32.totalorder %s67, %s83
      %p85 = scmp.eq.s32.totalorder %s26, 0
      %p86 = por %p84, %p85
      %s87 = ssub.s32 %s27, %s39
      %p88 = scmp.eq.s32.totalorder %s87, 0
      %s90 = sadd.s32 %s89, 1
      %s91 = scalar_select %p88, %s89, %s90
      %p94 = pneg %p88
      %p95 = scmp.eq.s32.totalorder %s20, 2
      %p96 = por %p94, %p95
      %p97 = scmp.ne.s32.totalorder %s89, %s92
      %p98 = scmp.eq.s32.totalorder %s20, 0
      %p99 = por %p97, %p98
      %p100 = scmp.ne.s32.totalorder %s89, %s92
      %p101 = scmp.eq.s32.totalorder %s25, 2
      %p102 = por %p100, %p101
      %p103 = scmp.ne.s32.totalorder %s92, %s93
      %p104 = scmp.eq.s32.totalorder %s25, 0
      %p105 = por %p103, %p104
      %p106 = scmp.ne.s32.totalorder %s92, %s93
      %p107 = scmp.eq.s32.totalorder %s26, 2
      %p108 = por %p106, %p107
      %p110 = scmp.ne.s32.totalorder %s93, %s109
      %p111 = scmp.eq.s32.totalorder %s26, 0
      %p112 = por %p110, %p111
      %s114 = sadd.s32 %s113, 1
      %p117 = scmp.eq.s32.totalorder %s20, 2
      %p118 = scmp.ne.s32.totalorder %s113, %s115
      %p119 = scmp.eq.s32.totalorder %s20, 0
      %p120 = por %p118, %p119
      %p121 = scmp.ne.s32.totalorder %s113, %s115
      %p122 = scmp.eq.s32.totalorder %s25, 2
      %p123 = por %p121, %p122
      %p124 = scmp.ne.s32.totalorder %s115, %s116
      %p125 = scmp.eq.s32.totalorder %s25, 0
      %p126 = por %p124, %p125
      %p127 = scmp.ne.s32.totalorder %s115, %s116
      %p128 = scmp.eq.s32.totalorder %s26, 2
      %p129 = por %p127, %p128
      %p131 = scmp.ne.s32.totalorder %s116, %s130
      %p132 = scmp.eq.s32.totalorder %s26, 0
      %p133 = por %p131, %p132
      %s135 = sadd.s32 %s134, 1
      %p138 = scmp.eq.s32.totalorder %s20, 2
      %p139 = scmp.ne.s32.totalorder %s134, %s136
      %p140 = scmp.eq.s32.totalorder %s20, 0
      %p141 = por %p139, %p140
      %p142 = scmp.ne.s32.totalorder %s134, %s136
      %p143 = scmp.eq.s32.totalorder %s25, 2
      %p144 = por %p142, %p143
      %p145 = scmp.ne.s32.totalorder %s136, %s137
      %p146 = scmp.eq.s32.totalorder %s25, 0
      %p147 = por %p145, %p146
      %p148 = scmp.ne.s32.totalorder %s136, %s137
      %p149 = scmp.eq.s32.totalorder %s26, 2
      %p150 = por %p148, %p149
      %p152 = scmp.ne.s32.totalorder %s137, %s151
      %p153 = scmp.eq.s32.totalorder %s26, 0
      %p154 = por %p152, %p153
      %s156 = sadd.s32 %s155, 1
      %p159 = scmp.eq.s32.totalorder %s20, 2
      %p160 = scmp.ne.s32.totalorder %s155, %s157
      %p161 = scmp.eq.s32.totalorder %s20, 0
      %p162 = por %p160, %p161
      %p163 = scmp.ne.s32.totalorder %s155, %s157
      %p164 = scmp.eq.s32.totalorder %s25, 2
      %p165 = por %p163, %p164
      %p166 = scmp.ne.s32.totalorder %s157, %s158
      %p167 = scmp.eq.s32.totalorder %s25, 0
      %p168 = por %p166, %p167
      %p169 = scmp.ne.s32.totalorder %s157, %s158
      %p170 = scmp.eq.s32.totalorder %s26, 2
      %p171 = por %p169, %p170
      %p173 = scmp.ne.s32.totalorder %s158, %s172
      %p174 = scmp.eq.s32.totalorder %s26, 0
      %p175 = por %p173, %p174
      %s177 = sadd.s32 %s176, 1
      %p180 = scmp.eq.s32.totalorder %s20, 2
      %p181 = scmp.ne.s32.totalorder %s176, %s178
      %p182 = scmp.eq.s32.totalorder %s20, 0
      %p183 = por %p181, %p182
      %p184 = scmp.ne.s32.totalorder %s176, %s178
      %p185 = scmp.eq.s32.totalorder %s25, 2
      %p186 = por %p184, %p185
      %p187 = scmp.ne.s32.totalorder %s178, %s179
      %p188 = scmp.eq.s32.totalorder %s25, 0
      %p189 = por %p187, %p188
      %p190 = scmp.ne.s32.totalorder %s178, %s179
      %p191 = scmp.eq.s32.totalorder %s26, 2
      %p192 = por %p190, %p191
      %p194 = scmp.ne.s32.totalorder %s179, %s193
      %p195 = scmp.eq.s32.totalorder %s26, 0
      %p196 = por %p194, %p195
      %s198 = sadd.s32 %s197, 1
      %p201 = scmp.eq.s32.totalorder %s20, 2
      %p202 = scmp.ne.s32.totalorder %s197, %s199
      %p203 = scmp.eq.s32.totalorder %s20, 0
      %p204 = por %p202, %p203
      %p205 = scmp.ne.s32.totalorder %s197, %s199
      %p206 = scmp.eq.s32.totalorder %s25, 2
      %p207 = por %p205, %p206
      %p208 = scmp.ne.s32.totalorder %s199, %s200
      %p209 = scmp.eq.s32.totalorder %s25, 0
      %p210 = por %p208, %p209
      %p211 = scmp.ne.s32.totalorder %s199, %s200
      %p212 = scmp.eq.s32.totalorder %s26, 2
      %p213 = por %p211, %p212
      %p215 = scmp.ne.s32.totalorder %s200, %s214
      %p216 = scmp.eq.s32.totalorder %s26, 0
      %p217 = por %p215, %p216
      %s219 = sadd.s32 %s218, 1
      %p222 = scmp.eq.s32.totalorder %s20, 2
      %p223 = scmp.ne.s32.totalorder %s218, %s220
      %p224 = scmp.eq.s32.totalorder %s20, 0
      %p225 = por %p223, %p224
      %p226 = scmp.ne.s32.totalorder %s218, %s220
      %p227 = scmp.eq.s32.totalorder %s25, 2
      %p228 = por %p226, %p227
      %p229 = scmp.ne.s32.totalorder %s220, %s221
      %p230 = scmp.eq.s32.totalorder %s25, 0
      %p231 = por %p229, %p230
      %p232 = scmp.ne.s32.totalorder %s220, %s221
      %p233 = scmp.eq.s32.totalorder %s26, 2
      %p234 = por %p232, %p233
      %p236 = scmp.ne.s32.totalorder %s221, %s235
      %p237 = scmp.eq.s32.totalorder %s26, 0
      %p238 = por %p236, %p237
      %s239 = ssub.s32 %s28, %s35
      %p240 = scmp.eq.s32.totalorder %s239, 0
      %s242 = sadd.s32 %s241, 1
      %s243 = scalar_select %p240, %s241, %s242
      %p246 = pneg %p240
      %p247 = scmp.eq.s32.totalorder %s20, 2
      %p248 = por %p246, %p247
      %p249 = scmp.ne.s32.totalorder %s241, %s244
      %p250 = scmp.eq.s32.totalorder %s20, 0
      %p251 = por %p249, %p250
      %p252 = scmp.ne.s32.totalorder %s241, %s244
      %p253 = scmp.eq.s32.totalorder %s25, 2
      %p254 = por %p252, %p253
      %p255 = scmp.ne.s32.totalorder %s244, %s245
      %p256 = scmp.eq.s32.totalorder %s25, 0
      %p257 = por %p255, %p256
      %p258 = scmp.ne.s32.totalorder %s244, %s245
      %p259 = scmp.eq.s32.totalorder %s26, 2
      %p260 = por %p258, %p259
      %p262 = scmp.ne.s32.totalorder %s245, %s261
      %p263 = scmp.eq.s32.totalorder %s26, 0
      %p264 = por %p262, %p263
      %s266 = sadd.s32 %s265, 1
      %p269 = scmp.eq.s32.totalorder %s20, 2
      %p270 = scmp.ne.s32.totalorder %s265, %s267
      %p271 = scmp.eq.s32.totalorder %s20, 0
      %p272 = por %p270, %p271
      %p273 = scmp.ne.s32.totalorder %s265, %s267
      %p274 = scmp.eq.s32.totalorder %s25, 2
      %p275 = por %p273, %p274
      %p276 = scmp.ne.s32.totalorder %s267, %s268
      %p277 = scmp.eq.s32.totalorder %s25, 0
      %p278 = por %p276, %p277
      %p279 = scmp.ne.s32.totalorder %s267, %s268
      %p280 = scmp.eq.s32.totalorder %s26, 2
      %p281 = por %p279, %p280
      %p283 = scmp.ne.s32.totalorder %s268, %s282
      %p284 = scmp.eq.s32.totalorder %s26, 0
      %p285 = por %p283, %p284
      %p286 = scmp.le.s32.totalorder 1, %s20
      %p287 = scmp.lt.s32.totalorder %s20, 4
      %p288 = pnand %p286, %p287
      %p289 = pneg %p288
      // Predicated region
      $region9: #{tpu_custom_call.1} parent=5 // pred_check
        _
      $region10: #{tpu_custom_call.1} parent=5 // pred_check_branch
        %291 = sbr.rel (%p288) target = $region12
      $region11: #{tpu_custom_call.1} parent=5 // pred_region
        %s292 = ssub.s32 %s20, 1
        // Predicated region
        $region13: #{tpu_custom_call.1} parent=11 // pred_check
          %p293 = pneg %p53
        $region14: #{tpu_custom_call.1} parent=11 // pred_check_branch
          %295 = sbr.rel (%p293) target = $region16
        $region15: #{tpu_custom_call.1} parent=11 // pred_region
          %s297 = ssub.s32 2048, 2048
          %298 = vsyncadd [#allocation5], %s297
          %s299 = sshll.u32 [#allocation4], 4
          %s300 = int_to_ptr.vmem [resolvable:$true] %s299
          %305 = dma.hbm_to_vmem [thread:$0]  %s0, 2048, %s300, [#allocation5], 128, 128, 8
        $region16: #{tpu_custom_call.1} parent=11 // pred_fallthru
          _
        // Predicated region
        $region17: #{tpu_custom_call.1} parent=11 // pred_check
          %p306 = pneg %p79
        $region18: #{tpu_custom_call.1} parent=11 // pred_check_branch
          %308 = sbr.rel (%p306) target = $region20
        $region19: #{tpu_custom_call.1} parent=11 // pred_region
          %s309 = smul.u32 16, %s30
          %s311 = ssub.s32 1024, 1024
          %312 = vsyncadd [#allocation8], %s311
          %s313 = smul.addr %s309, 64
          %s314 = scalar_lea.hbm %s1, %s313
          %s315 = sshll.u32 [#allocation7], 4
          %s316 = int_to_ptr.vmem [resolvable:$true] %s315
          %321 = dma.hbm_to_vmem [thread:$0]  %s314, 1024, %s316, [#allocation8], 64, 64, 4
        $region20: #{tpu_custom_call.1} parent=11 // pred_fallthru
          _
        // Predicated region
        $region21: #{tpu_custom_call.1} parent=11 // pred_check
          %p322 = pneg %p126
        $region22: #{tpu_custom_call.1} parent=11 // pred_check_branch
          %324 = sbr.rel (%p322) target = $region24
        $region23: #{tpu_custom_call.1} parent=11 // pred_region
          %s326 = ssub.s32 4096, 4096
          %327 = vsyncadd [#allocation8], %s326
          %s328 = sshll.u32 [#allocation10], 4
          %s329 = int_to_ptr.vmem [resolvable:$true] %s328
          %334 = dma.hbm_to_vmem [thread:$0]  %s3, 4096, %s329, [#allocation8], 128, 128, 8
        $region24: #{tpu_custom_call.1} parent=11 // pred_fallthru
          _
        // Predicated region
        $region25: #{tpu_custom_call.1} parent=11 // pred_check
          %p335 = pneg %p147
        $region26: #{tpu_custom_call.1} parent=11 // pred_check_branch
          %337 = sbr.rel (%p335) target = $region28
        $region27: #{tpu_custom_call.1} parent=11 // pred_region
          %s339 = ssub.s32 1024, 1024
          %340 = vsyncadd [#allocation12], %s339
          %s341 = sshll.u32 [#allocation11], 4
          %s342 = int_to_ptr.vmem [resolvable:$true] %s341
          %347 = dma.hbm_to_vmem [thread:$0]  %s4, 1024, %s342, [#allocation12], 64, 64, 4
        $region28: #{tpu_custom_call.1} parent=11 // pred_fallthru
          _
        // Predicated region
        $region29: #{tpu_custom_call.1} parent=11 // pred_check
          %p348 = pneg %p168
        $region30: #{tpu_custom_call.1} parent=11 // pred_check_branch
          %350 = sbr.rel (%p348) target = $region32
        $region31: #{tpu_custom_call.1} parent=11 // pred_region
          %s352 = ssub.s32 1024, 1024
          %353 = vsyncadd [#allocation12], %s352
          %s354 = sshll.u32 [#allocation13], 4
          %s355 = int_to_ptr.vmem [resolvable:$true] %s354
          %360 = dma.hbm_to_vmem [thread:$0]  %s5, 1024, %s355, [#allocation12], 64, 64, 4
        $region32: #{tpu_custom_call.1} parent=11 // pred_fallthru
          _
        // Predicated region
        $region33: #{tpu_custom_call.1} parent=11 // pred_check
          %p361 = pneg %p189
        $region34: #{tpu_custom_call.1} parent=11 // pred_check_branch
          %363 = sbr.rel (%p361) target = $region36
        $region35: #{tpu_custom_call.1} parent=11 // pred_region
          _
        $region36: #{tpu_custom_call.1} parent=11 // pred_fallthru
          _
        // Predicated region
        $region37: #{tpu_custom_call.1} parent=11 // pred_check
          %p364 = pneg %p210
        $region38: #{tpu_custom_call.1} parent=11 // pred_check_branch
          %366 = sbr.rel (%p364) target = $region40
        $region39: #{tpu_custom_call.1} parent=11 // pred_region
          _
        $region40: #{tpu_custom_call.1} parent=11 // pred_fallthru
          _
        // Predicated region
        $region41: #{tpu_custom_call.1} parent=11 // pred_check
          %p367 = pneg %p231
        $region42: #{tpu_custom_call.1} parent=11 // pred_check_branch
          %369 = sbr.rel (%p367) target = $region44
        $region43: #{tpu_custom_call.1} parent=11 // pred_region
          _
        $region44: #{tpu_custom_call.1} parent=11 // pred_fallthru
          _
        // Predicated region
        $region45: #{tpu_custom_call.1} parent=11 // pred_check
          %p370 = pneg %p257
        $region46: #{tpu_custom_call.1} parent=11 // pred_check_branch
          %372 = sbr.rel (%p370) target = $region48
        $region47: #{tpu_custom_call.1} parent=11 // pred_region
          %p373 = scmp.lt.s32.totalorder %s30, 0
          %s374 = scalar_select %p373, %s30, 0
          %s375 = smul.addr %s374, 4
          %s376 = scalar_lea.vmem %s9, %s375
        $region48: #{tpu_custom_call.1} parent=11 // pred_fallthru
          _
      $region12: #{tpu_custom_call.1} parent=5 // pred_fallthru
        _
      %p377 = scmp.lt.s32.totalorder %s20, 3
      // Predicated region
      $region49: #{tpu_custom_call.1} parent=5 // pred_check
        %p378 = pneg %p377
      $region50: #{tpu_custom_call.1} parent=5 // pred_check_branch
        %380 = sbr.rel (%p378) target = $region52
      $region51: #{tpu_custom_call.1} parent=5 // pred_region
        // Predicated region
        $region53: #{tpu_custom_call.1} parent=51 // pred_check
          %p381 = pneg %p99
        $region54: #{tpu_custom_call.1} parent=51 // pred_check_branch
          %383 = sbr.rel (%p381) target = $region56
        $region55: #{tpu_custom_call.1} parent=51 // pred_region
          %s384 = sand.u32 %s20, 1
          %s385 = scalar_lea.sflag [#allocation5], %s384
          %s386 = sand.u32 %s89, 1
          %s387 = smul.addr %s386, 64
          %s388 = scalar_lea.vmem [#allocation9], %s387
          %s390 = ssub.s32 1024, 1024
          %391 = vsyncadd %s385, %s390
          %s392 = smul.addr %s27, 16
          %s393 = smul.addr %s392, 64
          %s394 = scalar_lea.hbm %s2, %s393
          %s395 = sshll.u32 %s388, 4
          %s396 = int_to_ptr.vmem [resolvable:$true] %s395
          %401 = dma.hbm_to_vmem [thread:$0]  %s394, 1024, %s396, %s385, 64, 64, 4
        $region56: #{tpu_custom_call.1} parent=51 // pred_fallthru
          _
      $region52: #{tpu_custom_call.1} parent=5 // pred_fallthru
        _
      %p402 = scmp.le.s32.totalorder 1, %s20
      %p403 = scmp.lt.s32.totalorder %s20, 4
      %p404 = pnand %p402, %p403
      %p405 = pneg %p404
      // Predicated region
      $region57: #{tpu_custom_call.1} parent=5 // pred_check
        _
      $region58: #{tpu_custom_call.1} parent=5 // pred_check_branch
        %407 = sbr.rel (%p404) target = $region60
      $region59: #{tpu_custom_call.1} parent=5 // pred_region
        %s408 = ssub.s32 %s20, 1
        // Predicated region
        $region61: #{tpu_custom_call.1} parent=59 // pred_check
          %p409 = pneg %p53
        $region62: #{tpu_custom_call.1} parent=59 // pred_check_branch
          %411 = sbr.rel (%p409) target = $region64
        $region63: #{tpu_custom_call.1} parent=59 // pred_region
          %412 = dma.done [#allocation5], 2048
        $region64: #{tpu_custom_call.1} parent=59 // pred_fallthru
          _
        // Predicated region
        $region65: #{tpu_custom_call.1} parent=59 // pred_check
          %p413 = pneg %p79
        $region66: #{tpu_custom_call.1} parent=59 // pred_check_branch
          %415 = sbr.rel (%p413) target = $region68
        $region67: #{tpu_custom_call.1} parent=59 // pred_region
          %416 = dma.done [#allocation8], 1024
        $region68: #{tpu_custom_call.1} parent=59 // pred_fallthru
          _
        %s417 = sand.u32 %s25, 1
        %s418 = scalar_lea.sflag [#allocation5], %s417
        %s419 = sand.u32 %s92, 1
        %s420 = smul.addr %s419, 64
        %s421 = scalar_lea.vmem [#allocation9], %s420
        // Predicated region
        $region69: #{tpu_custom_call.1} parent=59 // pred_check
          %p422 = pneg %p105
        $region70: #{tpu_custom_call.1} parent=59 // pred_check_branch
          %424 = sbr.rel (%p422) target = $region72
        $region71: #{tpu_custom_call.1} parent=59 // pred_region
          %425 = dma.done %s418, 1024
        $region72: #{tpu_custom_call.1} parent=59 // pred_fallthru
          _
        // Predicated region
        $region73: #{tpu_custom_call.1} parent=59 // pred_check
          %p426 = pneg %p126
        $region74: #{tpu_custom_call.1} parent=59 // pred_check_branch
          %428 = sbr.rel (%p426) target = $region76
        $region75: #{tpu_custom_call.1} parent=59 // pred_region
          %429 = dma.done [#allocation8], 4096
        $region76: #{tpu_custom_call.1} parent=59 // pred_fallthru
          _
        // Predicated region
        $region77: #{tpu_custom_call.1} parent=59 // pred_check
          %p430 = pneg %p147
        $region78: #{tpu_custom_call.1} parent=59 // pred_check_branch
          %432 = sbr.rel (%p430) target = $region80
        $region79: #{tpu_custom_call.1} parent=59 // pred_region
          %433 = dma.done [#allocation12], 1024
        $region80: #{tpu_custom_call.1} parent=59 // pred_fallthru
          _
        // Predicated region
        $region81: #{tpu_custom_call.1} parent=59 // pred_check
          %p434 = pneg %p168
        $region82: #{tpu_custom_call.1} parent=59 // pred_check_branch
          %436 = sbr.rel (%p434) target = $region84
        $region83: #{tpu_custom_call.1} parent=59 // pred_region
          %437 = dma.done [#allocation12], 1024
        $region84: #{tpu_custom_call.1} parent=59 // pred_fallthru
          _
        %p438 = pneg %p53
        %p439 = pneg %p50
        %p440 = pneg %p79
        %p441 = pneg %p76
        %s442 = sand.u32 %s25, 1
        %s443 = scalar_lea.sflag [#allocation5], %s442
        %s444 = sand.u32 %s92, 1
        %s445 = smul.addr %s444, 64
        %s446 = scalar_lea.vmem [#allocation9], %s445
        %p447 = pneg %p105
        %p448 = pneg %p102
        %p449 = pneg %p126
        %p450 = pneg %p123
        %p451 = pneg %p147
        %p452 = pneg %p144
        %p453 = pneg %p168
        %p454 = pneg %p165
        %p455 = pneg %p189
        %p456 = pneg %p186
        %p457 = pneg %p210
        %p458 = pneg %p207
        %p459 = pneg %p231
        %p460 = pneg %p228
        %p461 = scmp.lt.s32.totalorder %s30, 0
        %s462 = scalar_select %p461, %s30, 0
        %s463 = smul.addr %s462, 4
        %s464 = scalar_lea.vmem %s9, %s463
        %p465 = pneg %p257
        %p466 = pneg %p254
        %p467 = pneg %p278
        %p468 = pneg %p275
        %s469 = smul.u32 16, %s30
        %p470 = scmp.lt.s32.totalorder %s30, 0
        %s471 = scalar_select %p470, %s30, 0
        %s472 = smul.addr %s471, 4
        %s473 = scalar_lea.vmem %s9, %s472
        %p475 = scmp.eq.s32.totalorder %s29, 0
        %p476 = scmp.eq.s32.totalorder %s30, 0
        %p477 = pnand %p475, %p476
        %p478 = pneg %p477
        // Predicated region
        $region85: #{tpu_custom_call.1} parent=59 // pred_check
          _
        $region86: #{tpu_custom_call.1} parent=59 // pred_check_branch
          %480 = sbr.rel (%p477) target = $region88
        $region87: #{tpu_custom_call.1} parent=59 // pred_region
          %v481 = vld [vmem:[#allocation4] sm:$0xff]
          %v482 = vld [vmem:[#allocation4 + $0x8] sm:$0xff]
          %v483 = vld [vmem:[#allocation4 + $0x10] sm:$0xff]
          %v484 = vld [vmem:[#allocation4 + $0x18] sm:$0xff]
          %v485 = vld [vmem:[#allocation4 + $0x20] sm:$0xff]
          %v486 = vld [vmem:[#allocation4 + $0x28] sm:$0xff]
          %v487 = vld [vmem:[#allocation4 + $0x30] sm:$0xff]
          %v488 = vld [vmem:[#allocation4 + $0x38] sm:$0xff]
          %v489 = vld [vmem:[#allocation4 + $0x40] sm:$0xff]
          %v490 = vld [vmem:[#allocation4 + $0x48] sm:$0xff]
          %v491 = vld [vmem:[#allocation4 + $0x50] sm:$0xff]
          %v492 = vld [vmem:[#allocation4 + $0x58] sm:$0xff]
          %v493 = vld [vmem:[#allocation4 + $0x60] sm:$0xff]
          %v494 = vld [vmem:[#allocation4 + $0x68] sm:$0xff]
          %v495 = vld [vmem:[#allocation4 + $0x70] sm:$0xff]
          %v496 = vld [vmem:[#allocation4 + $0x78] sm:$0xff]
          %497 = vst [vmem:[#allocation2] sm:$0xff] %v481
          %498 = vst [vmem:[#allocation2 + $0x8] sm:$0xff] %v482
          %499 = vst [vmem:[#allocation2 + $0x10] sm:$0xff] %v483
          %500 = vst [vmem:[#allocation2 + $0x18] sm:$0xff] %v484
          %501 = vst [vmem:[#allocation2 + $0x20] sm:$0xff] %v485
          %502 = vst [vmem:[#allocation2 + $0x28] sm:$0xff] %v486
          %503 = vst [vmem:[#allocation2 + $0x30] sm:$0xff] %v487
          %504 = vst [vmem:[#allocation2 + $0x38] sm:$0xff] %v488
          %505 = vst [vmem:[#allocation2 + $0x40] sm:$0xff] %v489
          %506 = vst [vmem:[#allocation2 + $0x48] sm:$0xff] %v490
          %507 = vst [vmem:[#allocation2 + $0x50] sm:$0xff] %v491
          %508 = vst [vmem:[#allocation2 + $0x58] sm:$0xff] %v492
          %509 = vst [vmem:[#allocation2 + $0x60] sm:$0xff] %v493
          %510 = vst [vmem:[#allocation2 + $0x68] sm:$0xff] %v494
          %511 = vst [vmem:[#allocation2 + $0x70] sm:$0xff] %v495
          %512 = vst [vmem:[#allocation2 + $0x78] sm:$0xff] %v496
          %513 = vst [vmem:[#allocation14] sm:$0xff] 0.0
        $region88: #{tpu_custom_call.1} parent=59 // pred_fallthru
          _
        // Predicated region
        $region89: #{tpu_custom_call.1} parent=59 // pred_check
          %p514 = pneg %p476
        $region90: #{tpu_custom_call.1} parent=59 // pred_check_branch
          %516 = sbr.rel (%p514) target = $region92
        $region91: #{tpu_custom_call.1} parent=59 // pred_region
          %v517 = vld [vmem:[#allocation2] sm:$0xff]
          %v518 = vld [vmem:[#allocation2 + $0x8] sm:$0xff]
          %v519 = vld [vmem:[#allocation2 + $0x10] sm:$0xff]
          %v520 = vld [vmem:[#allocation2 + $0x18] sm:$0xff]
          %v521 = vld [vmem:[#allocation2 + $0x20] sm:$0xff]
          %v522 = vld [vmem:[#allocation2 + $0x28] sm:$0xff]
          %v523 = vld [vmem:[#allocation2 + $0x30] sm:$0xff]
          %v524 = vld [vmem:[#allocation2 + $0x38] sm:$0xff]
          %v525 = vld [vmem:[#allocation2 + $0x40] sm:$0xff]
          %v526 = vld [vmem:[#allocation2 + $0x48] sm:$0xff]
          %v527 = vld [vmem:[#allocation2 + $0x50] sm:$0xff]
          %v528 = vld [vmem:[#allocation2 + $0x58] sm:$0xff]
          %v529 = vld [vmem:[#allocation2 + $0x60] sm:$0xff]
          %v530 = vld [vmem:[#allocation2 + $0x68] sm:$0xff]
          %v531 = vld [vmem:[#allocation2 + $0x70] sm:$0xff]
          %v532 = vld [vmem:[#allocation2 + $0x78] sm:$0xff]
          %v533 = vpack.c.bf16 %v518, %v517
          %v534 = vpack.c.bf16 %v520, %v519
          %v535 = vpack.c.bf16 %v522, %v521
          %v536 = vpack.c.bf16 %v524, %v523
          %v537 = vpack.c.bf16 %v526, %v525
          %v538 = vpack.c.bf16 %v528, %v527
          %v539 = vpack.c.bf16 %v530, %v529
          %v540 = vpack.c.bf16 %v532, %v531
          %v541 = vld [vmem:[%s421] sm:$0xf]
          %v542 = vld [vmem:[%s421 + $0x4] sm:$0xf]
          %v543 = vld [vmem:[%s421 + $0x8] sm:$0xf]
          %v544 = vld [vmem:[%s421 + $0xc] sm:$0xf]
          %v545 = vld [vmem:[%s421 + $0x10] sm:$0xf]
          %v546 = vld [vmem:[%s421 + $0x14] sm:$0xf]
          %v547 = vld [vmem:[%s421 + $0x18] sm:$0xf]
          %v548 = vld [vmem:[%s421 + $0x1c] sm:$0xf]
          %v549 = vld [vmem:[%s421 + $0x20] sm:$0xf]
          %v550 = vld [vmem:[%s421 + $0x24] sm:$0xf]
          %v551 = vld [vmem:[%s421 + $0x28] sm:$0xf]
          %v552 = vld [vmem:[%s421 + $0x2c] sm:$0xf]
          %v553 = vld [vmem:[%s421 + $0x30] sm:$0xf]
          %v554 = vld [vmem:[%s421 + $0x34] sm:$0xf]
          %v555 = vld [vmem:[%s421 + $0x38] sm:$0xf]
          %v556 = vld [vmem:[%s421 + $0x3c] sm:$0xf]
          %v573 = vunpack.c.l.b16 %v541
          %v574 = vunpack.c.l.b16 %v542
          %v575 = vunpack.c.l.b16 %v543
          %v576 = vunpack.c.l.b16 %v544
          %v577 = vunpack.c.l.b16 %v545
          %v578 = vunpack.c.l.b16 %v546
          %v579 = vunpack.c.l.b16 %v547
          %v580 = vunpack.c.l.b16 %v548
          %v581 = vunpack.c.l.b16 %v549
          %v582 = vunpack.c.l.b16 %v550
          %v583 = vunpack.c.l.b16 %v551
          %v584 = vunpack.c.l.b16 %v552
          %v585 = vunpack.c.l.b16 %v553
          %v586 = vunpack.c.l.b16 %v554
          %v587 = vunpack.c.l.b16 %v555
          %v588 = vunpack.c.l.b16 %v556
          %v589 = vpack.c.b16 %v574, %v573
          %v590 = vpack.c.b16 %v576, %v575
          %v591 = vpack.c.b16 %v578, %v577
          %v592 = vpack.c.b16 %v580, %v579
          %v593 = vpack.c.b16 %v582, %v581
          %v594 = vpack.c.b16 %v584, %v583
          %v595 = vpack.c.b16 %v586, %v585
          %v596 = vpack.c.b16 %v588, %v587
          %605 = vmatprep.subr.bf16.mxu0 0
          %606 = vmatpush1.bf16.msra.mxu0 %v589
          %607 = vmatprep.subr.bf16.mxu0 0
          %608 = vmatpush1.bf16.msra.mxu0 %v590
          %609 = vmatprep.subr.bf16.mxu0 0
          %610 = vmatpush1.bf16.msra.mxu0 %v591
          %611 = vmatprep.subr.bf16.mxu0 0
          %612 = vmatpush1.bf16.msra.mxu0 %v592
          %613 = vmatprep.subr.bf16.mxu0 0
          %614 = vmatpush1.bf16.msra.mxu0 %v593
          %615 = vmatprep.subr.bf16.mxu0 0
          %616 = vmatpush1.bf16.msra.mxu0 %v594
          %617 = vmatprep.subr.bf16.mxu0 0
          %618 = vmatpush1.bf16.msra.mxu0 %v595
          %619 = vmatprep.subr.bf16.mxu0 0
          %620 = vmatpush1.bf16.msra.mxu0 %v596
          %621 = vmatprep.subr.bf16.mxu0 0
          %622 = vmatpush1.bf16.msra.mxu0 0
          %623 = vmatprep.subr.bf16.mxu0 0
          %624 = vmatpush1.bf16.msra.mxu0 0
          %625 = vmatprep.subr.bf16.mxu0 0
          %626 = vmatpush1.bf16.msra.mxu0 0
          %627 = vmatprep.subr.bf16.mxu0 0
          %628 = vmatpush1.bf16.msra.mxu0 0
          %629 = vmatprep.subr.bf16.mxu0 0
          %630 = vmatpush1.bf16.msra.mxu0 0
          %631 = vmatprep.subr.bf16.mxu0 0
          %632 = vmatpush1.bf16.msra.mxu0 0
          %633 = vmatprep.subr.bf16.mxu0 0
          %634 = vmatpush1.bf16.msra.mxu0 0
          %635 = vmatprep.subr.bf16.mxu0 0
          %636 = vmatpush1.bf16.msra.mxu0 0
          %637 = vmatprep.mubr.bf16.mxu0 0
          %638 = vmatmul.mubr.bf16.gmra.mrb[0].mxu0 %v533
          %v639 = vpop.f32.mrb[0].mxu0
          %v640 = vadd.f32 0.0, %v639
          %v641 = vpop.f32.mrb[0].mxu0
          %v642 = vpop.f32.mrb[0].mxu0
          %v643 = vadd.f32 0.0, %v642
          %v644 = vpop.f32.mrb[0].mxu0
          %645 = vmatprep.mubr.bf16.mxu0 0
          %646 = vmatmul.mubr.bf16.gmra.mrb[0].mxu0 %v534
          %v647 = vpop.f32.mrb[0].mxu0
          %v648 = vadd.f32 0.0, %v647
          %v649 = vpop.f32.mrb[0].mxu0
          %v650 = vpop.f32.mrb[0].mxu0
          %v651 = vadd.f32 0.0, %v650
          %v652 = vpop.f32.mrb[0].mxu0
          %653 = vmatprep.mubr.bf16.mxu0 0
          %654 = vmatmul.mubr.bf16.gmra.mrb[0].mxu0 %v535
          %v655 = vpop.f32.mrb[0].mxu0
          %v656 = vadd.f32 0.0, %v655
          %v657 = vpop.f32.mrb[0].mxu0
          %v658 = vpop.f32.mrb[0].mxu0
          %v659 = vadd.f32 0.0, %v658
          %v660 = vpop.f32.mrb[0].mxu0
          %661 = vmatprep.mubr.bf16.mxu0 0
          %662 = vmatmul.mubr.bf16.gmra.mrb[0].mxu0 %v536
          %v663 = vpop.f32.mrb[0].mxu0
          %v664 = vadd.f32 0.0, %v663
          %v665 = vpop.f32.mrb[0].mxu0
          %v666 = vpop.f32.mrb[0].mxu0
          %v667 = vadd.f32 0.0, %v666
          %v668 = vpop.f32.mrb[0].mxu0
          %669 = vmatprep.mubr.bf16.mxu0 0
          %670 = vmatmul.mubr.bf16.gmra.mrb[0].mxu0 %v537
          %v671 = vpop.f32.mrb[0].mxu0
          %v672 = vadd.f32 0.0, %v671
          %v673 = vpop.f32.mrb[0].mxu0
          %v674 = vpop.f32.mrb[0].mxu0
          %v675 = vadd.f32 0.0, %v674
          %v676 = vpop.f32.mrb[0].mxu0
          %677 = vmatprep.mubr.bf16.mxu0 0
          %678 = vmatmul.mubr.bf16.gmra.mrb[0].mxu0 %v538
          %v679 = vpop.f32.mrb[0].mxu0
          %v680 = vadd.f32 0.0, %v679
          %v681 = vpop.f32.mrb[0].mxu0
          %v682 = vpop.f32.mrb[0].mxu0
          %v683 = vadd.f32 0.0, %v682
          %v684 = vpop.f32.mrb[0].mxu0
          %685 = vmatprep.mubr.bf16.mxu0 0
          %686 = vmatmul.mubr.bf16.gmra.mrb[0].mxu0 %v539
          %v687 = vpop.f32.mrb[0].mxu0
          %v688 = vadd.f32 0.0, %v687
          %v689 = vpop.f32.mrb[0].mxu0
          %v690 = vpop.f32.mrb[0].mxu0
          %v691 = vadd.f32 0.0, %v690
          %v692 = vpop.f32.mrb[0].mxu0
          %693 = vmatprep.mubr.bf16.mxu0 0
          %694 = vmatmul.mubr.bf16.gmra.mrb[0].mxu0 %v540
          %v695 = vpop.f32.mrb[0].mxu0
          %v696 = vadd.f32 0.0, %v695
          %v697 = vpop.f32.mrb[0].mxu0
          %v698 = vpop.f32.mrb[0].mxu0
          %v699 = vadd.f32 0.0, %v698
          %v700 = vpop.f32.mrb[0].mxu0
          %701 = vdwg.mxu0
          %v702 = vpack.c.bf16 %v643, %v640
          %v703 = vpack.c.bf16 %v651, %v648
          %v704 = vpack.c.bf16 %v659, %v656
          %v705 = vpack.c.bf16 %v667, %v664
          %v706 = vpack.c.bf16 %v675, %v672
          %v707 = vpack.c.bf16 %v683, %v680
          %v708 = vpack.c.bf16 %v691, %v688
          %v709 = vpack.c.bf16 %v699, %v696
          %710 = vst [vmem:[#allocation3] sm:$0xff] %v702
          %711 = vst [vmem:[#allocation3 + $0x8] sm:$0xff] %v703
          %712 = vst [vmem:[#allocation3 + $0x10] sm:$0xff] %v704
          %713 = vst [vmem:[#allocation3 + $0x18] sm:$0xff] %v705
          %714 = vst [vmem:[#allocation3 + $0x20] sm:$0xff] %v706
          %715 = vst [vmem:[#allocation3 + $0x28] sm:$0xff] %v707
          %716 = vst [vmem:[#allocation3 + $0x30] sm:$0xff] %v708
          %717 = vst [vmem:[#allocation3 + $0x38] sm:$0xff] %v709
        $region92: #{tpu_custom_call.1} parent=59 // pred_fallthru
          _
        %s718 = smul.u32 %s30, 128
        %s719 = scalar_lea.vmem [#allocation2], %s718
        %v720 = vld [vmem:[%s719] sm:$0xff]
        %v721 = vld [vmem:[%s719 + $0x8] sm:$0xff]
        %v722 = vld [vmem:[%s719 + $0x10] sm:$0xff]
        %v723 = vld [vmem:[%s719 + $0x18] sm:$0xff]
        %v724 = vld [vmem:[%s719 + $0x20] sm:$0xff]
        %v725 = vld [vmem:[%s719 + $0x28] sm:$0xff]
        %v726 = vld [vmem:[%s719 + $0x30] sm:$0xff]
        %v727 = vld [vmem:[%s719 + $0x38] sm:$0xff]
        %v728 = vld [vmem:[%s719 + $0x40] sm:$0xff]
        %v729 = vld [vmem:[%s719 + $0x48] sm:$0xff]
        %v730 = vld [vmem:[%s719 + $0x50] sm:$0xff]
        %v731 = vld [vmem:[%s719 + $0x58] sm:$0xff]
        %v732 = vld [vmem:[%s719 + $0x60] sm:$0xff]
        %v733 = vld [vmem:[%s719 + $0x68] sm:$0xff]
        %v734 = vld [vmem:[%s719 + $0x70] sm:$0xff]
        %v735 = vld [vmem:[%s719 + $0x78] sm:$0xff]
        %v736 = vpack.c.bf16 %v721, %v720
        %v737 = vpack.c.bf16 %v723, %v722
        %v738 = vpack.c.bf16 %v725, %v724
        %v739 = vpack.c.bf16 %v727, %v726
        %v740 = vpack.c.bf16 %v729, %v728
        %v741 = vpack.c.bf16 %v731, %v730
        %v742 = vpack.c.bf16 %v733, %v732
        %v743 = vpack.c.bf16 %v735, %v734
        %v744 = vld [vmem:[#allocation7] sm:$0xf]
        %v745 = vld [vmem:[#allocation7 + $0x4] sm:$0xf]
        %v746 = vld [vmem:[#allocation7 + $0x8] sm:$0xf]
        %v747 = vld [vmem:[#allocation7 + $0xc] sm:$0xf]
        %v748 = vld [vmem:[#allocation7 + $0x10] sm:$0xf]
        %v749 = vld [vmem:[#allocation7 + $0x14] sm:$0xf]
        %v750 = vld [vmem:[#allocation7 + $0x18] sm:$0xf]
        %v751 = vld [vmem:[#allocation7 + $0x1c] sm:$0xf]
        %v752 = vld [vmem:[#allocation7 + $0x20] sm:$0xf]
        %v753 = vld [vmem:[#allocation7 + $0x24] sm:$0xf]
        %v754 = vld [vmem:[#allocation7 + $0x28] sm:$0xf]
        %v755 = vld [vmem:[#allocation7 + $0x2c] sm:$0xf]
        %v756 = vld [vmem:[#allocation7 + $0x30] sm:$0xf]
        %v757 = vld [vmem:[#allocation7 + $0x34] sm:$0xf]
        %v758 = vld [vmem:[#allocation7 + $0x38] sm:$0xf]
        %v759 = vld [vmem:[#allocation7 + $0x3c] sm:$0xf]
        %v760 = vld [vmem:[#allocation3] sm:$0xff]
        %v761 = vld [vmem:[#allocation3 + $0x8] sm:$0xff]
        %v762 = vld [vmem:[#allocation3 + $0x10] sm:$0xff]
        %v763 = vld [vmem:[#allocation3 + $0x18] sm:$0xff]
        %v764 = vld [vmem:[#allocation3 + $0x20] sm:$0xff]
        %v765 = vld [vmem:[#allocation3 + $0x28] sm:$0xff]
        %v766 = vld [vmem:[#allocation3 + $0x30] sm:$0xff]
        %v767 = vld [vmem:[#allocation3 + $0x38] sm:$0xff]
        %v784 = vunpack.c.l.b16 %v744
        %v785 = vunpack.c.l.b16 %v745
        %v786 = vunpack.c.l.b16 %v746
        %v787 = vunpack.c.l.b16 %v747
        %v788 = vunpack.c.l.b16 %v748
        %v789 = vunpack.c.l.b16 %v749
        %v790 = vunpack.c.l.b16 %v750
        %v791 = vunpack.c.l.b16 %v751
        %v792 = vunpack.c.l.b16 %v752
        %v793 = vunpack.c.l.b16 %v753
        %v794 = vunpack.c.l.b16 %v754
        %v795 = vunpack.c.l.b16 %v755
        %v796 = vunpack.c.l.b16 %v756
        %v797 = vunpack.c.l.b16 %v757
        %v798 = vunpack.c.l.b16 %v758
        %v799 = vunpack.c.l.b16 %v759
        %v800 = vpack.c.b16 %v785, %v784
        %v801 = vpack.c.b16 %v787, %v786
        %v802 = vpack.c.b16 %v789, %v788
        %v803 = vpack.c.b16 %v791, %v790
        %v804 = vpack.c.b16 %v793, %v792
        %v805 = vpack.c.b16 %v795, %v794
        %v806 = vpack.c.b16 %v797, %v796
        %v807 = vpack.c.b16 %v799, %v798
        %816 = vmatprep.subr.bf16.mxu0 0
        %817 = vmatpush1.bf16.msra.mxu0 %v760
        %818 = vmatprep.subr.bf16.mxu0 0
        %819 = vmatpush1.bf16.msra.mxu0 %v761
        %820 = vmatprep.subr.bf16.mxu0 0
        %821 = vmatpush1.bf16.msra.mxu0 %v762
        %822 = vmatprep.subr.bf16.mxu0 0
        %823 = vmatpush1.bf16.msra.mxu0 %v763
        %824 = vmatprep.subr.bf16.mxu0 0
        %825 = vmatpush1.bf16.msra.mxu0 %v764
        %826 = vmatprep.subr.bf16.mxu0 0
        %827 = vmatpush1.bf16.msra.mxu0 %v765
        %828 = vmatprep.subr.bf16.mxu0 0
        %829 = vmatpush1.bf16.msra.mxu0 %v766
        %830 = vmatprep.subr.bf16.mxu0 0
        %831 = vmatpush1.bf16.msra.mxu0 %v767
        %832 = vmatprep.subr.bf16.mxu0 0
        %833 = vmatpush1.bf16.msra.mxu0 0
        %834 = vmatprep.subr.bf16.mxu0 0
        %835 = vmatpush1.bf16.msra.mxu0 0
        %836 = vmatprep.subr.bf16.mxu0 0
        %837 = vmatpush1.bf16.msra.mxu0 0
        %838 = vmatprep.subr.bf16.mxu0 0
        %839 = vmatpush1.bf16.msra.mxu0 0
        %840 = vmatprep.subr.bf16.mxu0 0
        %841 = vmatpush1.bf16.msra.mxu0 0
        %842 = vmatprep.subr.bf16.mxu0 0
        %843 = vmatpush1.bf16.msra.mxu0 0
        %844 = vmatprep.subr.bf16.mxu0 0
        %845 = vmatpush1.bf16.msra.mxu0 0
        %846 = vmatprep.subr.bf16.mxu0 0
        %847 = vmatpush1.bf16.msra.mxu0 0
        %848 = vmatprep.mubr.bf16.mxu0 0
        %849 = vmatmul.mubr.bf16.gmra.mrb[0].mxu0 %v800
        %v850 = vpop.f32.mrb[0].mxu0
        %v851 = vadd.f32 0.0, %v850
        %v852 = vpop.f32.mrb[0].mxu0
        %v853 = vpop.f32.mrb[0].mxu0
        %v854 = vadd.f32 0.0, %v853
        %v855 = vpop.f32.mrb[0].mxu0
        %856 = vmatprep.mubr.bf16.mxu0 0
        %857 = vmatmul.mubr.bf16.gmra.mrb[0].mxu0 %v801
        %v858 = vpop.f32.mrb[0].mxu0
        %v859 = vadd.f32 0.0, %v858
        %v860 = vpop.f32.mrb[0].mxu0
        %v861 = vpop.f32.mrb[0].mxu0
        %v862 = vadd.f32 0.0, %v861
        %v863 = vpop.f32.mrb[0].mxu0
        %864 = vmatprep.mubr.bf16.mxu0 0
        %865 = vmatmul.mubr.bf16.gmra.mrb[0].mxu0 %v802
        %v866 = vpop.f32.mrb[0].mxu0
        %v867 = vadd.f32 0.0, %v866
        %v868 = vpop.f32.mrb[0].mxu0
        %v869 = vpop.f32.mrb[0].mxu0
        %v870 = vadd.f32 0.0, %v869
        %v871 = vpop.f32.mrb[0].mxu0
        %872 = vmatprep.mubr.bf16.mxu0 0
        %873 = vmatmul.mubr.bf16.gmra.mrb[0].mxu0 %v803
        %v874 = vpop.f32.mrb[0].mxu0
        %v875 = vadd.f32 0.0, %v874
        %v876 = vpop.f32.mrb[0].mxu0
        %v877 = vpop.f32.mrb[0].mxu0
        %v878 = vadd.f32 0.0, %v877
        %v879 = vpop.f32.mrb[0].mxu0
        %880 = vmatprep.mubr.bf16.mxu0 0
        %881 = vmatmul.mubr.bf16.gmra.mrb[0].mxu0 %v804
        %v882 = vpop.f32.mrb[0].mxu0
        %v883 = vadd.f32 0.0, %v882
        %v884 = vpop.f32.mrb[0].mxu0
        %v885 = vpop.f32.mrb[0].mxu0
        %v886 = vadd.f32 0.0, %v885
        %v887 = vpop.f32.mrb[0].mxu0
        %888 = vmatprep.mubr.bf16.mxu0 0
        %889 = vmatmul.mubr.bf16.gmra.mrb[0].mxu0 %v805
        %v890 = vpop.f32.mrb[0].mxu0
        %v891 = vadd.f32 0.0, %v890
        %v892 = vpop.f32.mrb[0].mxu0
        %v893 = vpop.f32.mrb[0].mxu0
        %v894 = vadd.f32 0.0, %v893
        %v895 = vpop.f32.mrb[0].mxu0
        %896 = vmatprep.mubr.bf16.mxu0 0
        %897 = vmatmul.mubr.bf16.gmra.mrb[0].mxu0 %v806
        %v898 = vpop.f32.mrb[0].mxu0
        %v899 = vadd.f32 0.0, %v898
        %v900 = vpop.f32.mrb[0].mxu0
        %v901 = vpop.f32.mrb[0].mxu0
        %v902 = vadd.f32 0.0, %v901
        %v903 = vpop.f32.mrb[0].mxu0
        %904 = vmatprep.mubr.bf16.mxu0 0
        %905 = vmatmul.mubr.bf16.gmra.mrb[0].mxu0 %v807
        %v906 = vpop.f32.mrb[0].mxu0
        %v907 = vadd.f32 0.0, %v906
        %v908 = vpop.f32.mrb[0].mxu0
        %v909 = vpop.f32.mrb[0].mxu0
        %v910 = vadd.f32 0.0, %v909
        %v911 = vpop.f32.mrb[0].mxu0
        %912 = vdwg.mxu0
        %v913 = vpack.c.bf16 %v854, %v851
        %v914 = vpack.c.bf16 %v862, %v859
        %v915 = vpack.c.bf16 %v870, %v867
        %v916 = vpack.c.bf16 %v878, %v875
        %v917 = vpack.c.bf16 %v886, %v883
        %v918 = vpack.c.bf16 %v894, %v891
        %v919 = vpack.c.bf16 %v902, %v899
        %v920 = vpack.c.bf16 %v910, %v907
        %v921 = vld [vmem:[#allocation10] sm:$0xff]
        %v922 = vld [vmem:[#allocation10 + $0x8] sm:$0xff]
        %v923 = vld [vmem:[#allocation10 + $0x10] sm:$0xff]
        %v924 = vld [vmem:[#allocation10 + $0x18] sm:$0xff]
        %v925 = vld [vmem:[#allocation10 + $0x20] sm:$0xff]
        %v926 = vld [vmem:[#allocation10 + $0x28] sm:$0xff]
        %v927 = vld [vmem:[#allocation10 + $0x30] sm:$0xff]
        %v928 = vld [vmem:[#allocation10 + $0x38] sm:$0xff]
        %v929 = vld [vmem:[#allocation10 + $0x40] sm:$0xff]
        %v930 = vld [vmem:[#allocation10 + $0x48] sm:$0xff]
        %v931 = vld [vmem:[#allocation10 + $0x50] sm:$0xff]
        %v932 = vld [vmem:[#allocation10 + $0x58] sm:$0xff]
        %v933 = vld [vmem:[#allocation10 + $0x60] sm:$0xff]
        %v934 = vld [vmem:[#allocation10 + $0x68] sm:$0xff]
        %v935 = vld [vmem:[#allocation10 + $0x70] sm:$0xff]
        %v936 = vld [vmem:[#allocation10 + $0x78] sm:$0xff]
        %v937 = vld [vmem:[#allocation10 + $0x80] sm:$0xff]
        %v938 = vld [vmem:[#allocation10 + $0x88] sm:$0xff]
        %v939 = vld [vmem:[#allocation10 + $0x90] sm:$0xff]
        %v940 = vld [vmem:[#allocation10 + $0x98] sm:$0xff]
        %v941 = vld [vmem:[#allocation10 + $0xa0] sm:$0xff]
        %v942 = vld [vmem:[#allocation10 + $0xa8] sm:$0xff]
        %v943 = vld [vmem:[#allocation10 + $0xb0] sm:$0xff]
        %v944 = vld [vmem:[#allocation10 + $0xb8] sm:$0xff]
        %v945 = vld [vmem:[#allocation10 + $0xc0] sm:$0xff]
        %v946 = vld [vmem:[#allocation10 + $0xc8] sm:$0xff]
        %v947 = vld [vmem:[#allocation10 + $0xd0] sm:$0xff]
        %v948 = vld [vmem:[#allocation10 + $0xd8] sm:$0xff]
        %v949 = vld [vmem:[#allocation10 + $0xe0] sm:$0xff]
        %v950 = vld [vmem:[#allocation10 + $0xe8] sm:$0xff]
        %v951 = vld [vmem:[#allocation10 + $0xf0] sm:$0xff]
        %v952 = vld [vmem:[#allocation10 + $0xf8] sm:$0xff]
        %v953 = vld [vmem:[%s6] sm:$0x3]
        %v955 = vlaneseq
        %v956 = vshrl.u32 %v955, 7
        %v957 = vsub.s32 0, %v956
        %v958 = vrot.slane %v953, %v957
        %v959 = vlaneseq
        %v960 = vshrl.u32 %v959, 7
        %v961 = vsub.s32 1, %v960
        %v962 = vrot.slane %v953, %v961
        %v997 = vunpack.c.l.b16 %v921
        %v998 = vunpack.c.h.b16 %v921
        %v999 = vunpack.c.l.b16 %v922
        %v1000 = vunpack.c.h.b16 %v922
        %v1001 = vunpack.c.l.b16 %v923
        %v1002 = vunpack.c.h.b16 %v923
        %v1003 = vunpack.c.l.b16 %v924
        %v1004 = vunpack.c.h.b16 %v924
        %v1005 = vunpack.c.l.b16 %v925
        %v1006 = vunpack.c.h.b16 %v925
        %v1007 = vunpack.c.l.b16 %v926
        %v1008 = vunpack.c.h.b16 %v926
        %v1009 = vunpack.c.l.b16 %v927
        %v1010 = vunpack.c.h.b16 %v927
        %v1011 = vunpack.c.l.b16 %v928
        %v1012 = vunpack.c.h.b16 %v928
        %v1013 = vunpack.c.l.b16 %v929
        %v1014 = vunpack.c.h.b16 %v929
        %v1015 = vunpack.c.l.b16 %v930
        %v1016 = vunpack.c.h.b16 %v930
        %v1017 = vunpack.c.l.b16 %v931
        %v1018 = vunpack.c.h.b16 %v931
        %v1019 = vunpack.c.l.b16 %v932
        %v1020 = vunpack.c.h.b16 %v932
        %v1021 = vunpack.c.l.b16 %v933
        %v1022 = vunpack.c.h.b16 %v933
        %v1023 = vunpack.c.l.b16 %v934
        %v1024 = vunpack.c.h.b16 %v934
        %v1025 = vunpack.c.l.b16 %v935
        %v1026 = vunpack.c.h.b16 %v935
        %v1027 = vunpack.c.l.b16 %v936
        %v1028 = vunpack.c.h.b16 %v936
        %v1029 = vunpack.c.l.b16 %v937
        %v1030 = vunpack.c.h.b16 %v937
        %v1031 = vunpack.c.l.b16 %v938
        %v1032 = vunpack.c.h.b16 %v938
        %v1033 = vunpack.c.l.b16 %v939
        %v1034 = vunpack.c.h.b16 %v939
        %v1035 = vunpack.c.l.b16 %v940
        %v1036 = vunpack.c.h.b16 %v940
        %v1037 = vunpack.c.l.b16 %v941
        %v1038 = vunpack.c.h.b16 %v941
        %v1039 = vunpack.c.l.b16 %v942
        %v1040 = vunpack.c.h.b16 %v942
        %v1041 = vunpack.c.l.b16 %v943
        %v1042 = vunpack.c.h.b16 %v943
        %v1043 = vunpack.c.l.b16 %v944
        %v1044 = vunpack.c.h.b16 %v944
        %v1045 = vunpack.c.l.b16 %v945
        %v1046 = vunpack.c.h.b16 %v945
        %v1047 = vunpack.c.l.b16 %v946
        %v1048 = vunpack.c.h.b16 %v946
        %v1049 = vunpack.c.l.b16 %v947
        %v1050 = vunpack.c.h.b16 %v947
        %v1051 = vunpack.c.l.b16 %v948
        %v1052 = vunpack.c.h.b16 %v948
        %v1053 = vunpack.c.l.b16 %v949
        %v1054 = vunpack.c.h.b16 %v949
        %v1055 = vunpack.c.l.b16 %v950
        %v1056 = vunpack.c.h.b16 %v950
        %v1057 = vunpack.c.l.b16 %v951
        %v1058 = vunpack.c.h.b16 %v951
        %v1059 = vunpack.c.l.b16 %v952
        %v1060 = vunpack.c.h.b16 %v952
        %v1061 = vpack.c.b16 %v999, %v997
        %v1062 = vpack.c.b16 %v1000, %v998
        %v1063 = vpack.c.b16 %v1003, %v1001
        %v1064 = vpack.c.b16 %v1004, %v1002
        %v1065 = vpack.c.b16 %v1007, %v1005
        %v1066 = vpack.c.b16 %v1008, %v1006
        %v1067 = vpack.c.b16 %v1011, %v1009
        %v1068 = vpack.c.b16 %v1012, %v1010
        %v1069 = vpack.c.b16 %v1015, %v1013
        %v1070 = vpack.c.b16 %v1016, %v1014
        %v1071 = vpack.c.b16 %v1019, %v1017
        %v1072 = vpack.c.b16 %v1020, %v1018
        %v1073 = vpack.c.b16 %v1023, %v1021
        %v1074 = vpack.c.b16 %v1024, %v1022
        %v1075 = vpack.c.b16 %v1027, %v1025
        %v1076 = vpack.c.b16 %v1028, %v1026
        %v1077 = vpack.c.b16 %v1031, %v1029
        %v1078 = vpack.c.b16 %v1032, %v1030
        %v1079 = vpack.c.b16 %v1035, %v1033
        %v1080 = vpack.c.b16 %v1036, %v1034
        %v1081 = vpack.c.b16 %v1039, %v1037
        %v1082 = vpack.c.b16 %v1040, %v1038
        %v1083 = vpack.c.b16 %v1043, %v1041
        %v1084 = vpack.c.b16 %v1044, %v1042
        %v1085 = vpack.c.b16 %v1047, %v1045
        %v1086 = vpack.c.b16 %v1048, %v1046
        %v1087 = vpack.c.b16 %v1051, %v1049
        %v1088 = vpack.c.b16 %v1052, %v1050
        %v1089 = vpack.c.b16 %v1055, %v1053
        %v1090 = vpack.c.b16 %v1056, %v1054
        %v1091 = vpack.c.b16 %v1059, %v1057
        %v1092 = vpack.c.b16 %v1060, %v1058
        %1125 = vmatprep.subr.bf16.mxu0 %v1062
        %1126 = vmatpush1.bf16.msra.mxu0 %v1061
        %1127 = vmatprep.subr.bf16.mxu0 %v1064
        %1128 = vmatpush1.bf16.msra.mxu0 %v1063
        %1129 = vmatprep.subr.bf16.mxu0 %v1066
        %1130 = vmatpush1.bf16.msra.mxu0 %v1065
        %1131 = vmatprep.subr.bf16.mxu0 %v1068
        %1132 = vmatpush1.bf16.msra.mxu0 %v1067
        %1133 = vmatprep.subr.bf16.mxu0 %v1070
        %1134 = vmatpush1.bf16.msra.mxu0 %v1069
        %1135 = vmatprep.subr.bf16.mxu0 %v1072
        %1136 = vmatpush1.bf16.msra.mxu0 %v1071
        %1137 = vmatprep.subr.bf16.mxu0 %v1074
        %1138 = vmatpush1.bf16.msra.mxu0 %v1073
        %1139 = vmatprep.subr.bf16.mxu0 %v1076
        %1140 = vmatpush1.bf16.msra.mxu0 %v1075
        %1141 = vmatprep.subr.bf16.mxu0 %v1078
        %1142 = vmatpush1.bf16.msra.mxu0 %v1077
        %1143 = vmatprep.subr.bf16.mxu0 %v1080
        %1144 = vmatpush1.bf16.msra.mxu0 %v1079
        %1145 = vmatprep.subr.bf16.mxu0 %v1082
        %1146 = vmatpush1.bf16.msra.mxu0 %v1081
        %1147 = vmatprep.subr.bf16.mxu0 %v1084
        %1148 = vmatpush1.bf16.msra.mxu0 %v1083
        %1149 = vmatprep.subr.bf16.mxu0 %v1086
        %1150 = vmatpush1.bf16.msra.mxu0 %v1085
        %1151 = vmatprep.subr.bf16.mxu0 %v1088
        %1152 = vmatpush1.bf16.msra.mxu0 %v1087
        %1153 = vmatprep.subr.bf16.mxu0 %v1090
        %1154 = vmatpush1.bf16.msra.mxu0 %v1089
        %1155 = vmatprep.subr.bf16.mxu0 %v1092
        %1156 = vmatpush1.bf16.msra.mxu0 %v1091
        %1157 = vmatprep.mubr.bf16.mxu0 %v736
        %1158 = vmatmul.mubr.bf16.gmra.mrb[0].mxu0 %v913
        %v1159 = vpop.f32.mrb[0].mxu0
        %v1160 = vadd.f32 %v958, %v1159
        %v1161 = vpop.f32.mrb[0].mxu0
        %v1162 = vadd.f32 %v962, %v1161
        %v1163 = vpop.f32.mrb[0].mxu0
        %v1164 = vadd.f32 %v958, %v1163
        %v1165 = vpop.f32.mrb[0].mxu0
        %v1166 = vadd.f32 %v962, %v1165
        %1167 = vmatprep.mubr.bf16.mxu0 %v737
        %1168 = vmatmul.mubr.bf16.gmra.mrb[0].mxu0 %v914
        %v1169 = vpop.f32.mrb[0].mxu0
        %v1170 = vadd.f32 %v958, %v1169
        %v1171 = vpop.f32.mrb[0].mxu0
        %v1172 = vadd.f32 %v962, %v1171
        %v1173 = vpop.f32.mrb[0].mxu0
        %v1174 = vadd.f32 %v958, %v1173
        %v1175 = vpop.f32.mrb[0].mxu0
        %v1176 = vadd.f32 %v962, %v1175
        %1177 = vmatprep.mubr.bf16.mxu0 %v738
        %1178 = vmatmul.mubr.bf16.gmra.mrb[0].mxu0 %v915
        %v1179 = vpop.f32.mrb[0].mxu0
        %v1180 = vadd.f32 %v958, %v1179
        %v1181 = vpop.f32.mrb[0].mxu0
        %v1182 = vadd.f32 %v962, %v1181
        %v1183 = vpop.f32.mrb[0].mxu0
        %v1184 = vadd.f32 %v958, %v1183
        %v1185 = vpop.f32.mrb[0].mxu0
        %v1186 = vadd.f32 %v962, %v1185
        %1187 = vmatprep.mubr.bf16.mxu0 %v739
        %1188 = vmatmul.mubr.bf16.gmra.mrb[0].mxu0 %v916
        %v1189 = vpop.f32.mrb[0].mxu0
        %v1190 = vadd.f32 %v958, %v1189
        %v1191 = vpop.f32.mrb[0].mxu0
        %v1192 = vadd.f32 %v962, %v1191
        %v1193 = vpop.f32.mrb[0].mxu0
        %v1194 = vadd.f32 %v958, %v1193
        %v1195 = vpop.f32.mrb[0].mxu0
        %v1196 = vadd.f32 %v962, %v1195
        %1197 = vmatprep.mubr.bf16.mxu0 %v740
        %1198 = vmatmul.mubr.bf16.gmra.mrb[0].mxu0 %v917
        %v1199 = vpop.f32.mrb[0].mxu0
        %v1200 = vadd.f32 %v958, %v1199
        %v1201 = vpop.f32.mrb[0].mxu0
        %v1202 = vadd.f32 %v962, %v1201
        %v1203 = vpop.f32.mrb[0].mxu0
        %v1204 = vadd.f32 %v958, %v1203
        %v1205 = vpop.f32.mrb[0].mxu0
        %v1206 = vadd.f32 %v962, %v1205
        %1207 = vmatprep.mubr.bf16.mxu0 %v741
        %1208 = vmatmul.mubr.bf16.gmra.mrb[0].mxu0 %v918
        %v1209 = vpop.f32.mrb[0].mxu0
        %v1210 = vadd.f32 %v958, %v1209
        %v1211 = vpop.f32.mrb[0].mxu0
        %v1212 = vadd.f32 %v962, %v1211
        %v1213 = vpop.f32.mrb[0].mxu0
        %v1214 = vadd.f32 %v958, %v1213
        %v1215 = vpop.f32.mrb[0].mxu0
        %v1216 = vadd.f32 %v962, %v1215
        %1217 = vmatprep.mubr.bf16.mxu0 %v742
        %1218 = vmatmul.mubr.bf16.gmra.mrb[0].mxu0 %v919
        %v1219 = vpop.f32.mrb[0].mxu0
        %v1220 = vadd.f32 %v958, %v1219
        %v1221 = vpop.f32.mrb[0].mxu0
        %v1222 = vadd.f32 %v962, %v1221
        %v1223 = vpop.f32.mrb[0].mxu0
        %v1224 = vadd.f32 %v958, %v1223
        %v1225 = vpop.f32.mrb[0].mxu0
        %v1226 = vadd.f32 %v962, %v1225
        %1227 = vmatprep.mubr.bf16.mxu0 %v743
        %1228 = vmatmul.mubr.bf16.gmra.mrb[0].mxu0 %v920
        %v1229 = vpop.f32.mrb[0].mxu0
        %v1230 = vadd.f32 %v958, %v1229
        %v1231 = vpop.f32.mrb[0].mxu0
        %v1232 = vadd.f32 %v962, %v1231
        %v1233 = vpop.f32.mrb[0].mxu0
        %v1234 = vadd.f32 %v958, %v1233
        %v1235 = vpop.f32.mrb[0].mxu0
        %v1236 = vadd.f32 %v962, %v1235
        %1237 = vdwg.mxu0
        %v1238 = vxor.u32 %v1160, 2147483648
        %v1239 = vxor.u32 %v1162, 2147483648
        %v1240 = vxor.u32 %v1164, 2147483648
        %v1241 = vxor.u32 %v1166, 2147483648
        %v1242 = vxor.u32 %v1170, 2147483648
        %v1243 = vxor.u32 %v1172, 2147483648
        %v1244 = vxor.u32 %v1174, 2147483648
        %v1245 = vxor.u32 %v1176, 2147483648
        %v1246 = vxor.u32 %v1180, 2147483648
        %v1247 = vxor.u32 %v1182, 2147483648
        %v1248 = vxor.u32 %v1184, 2147483648
        %v1249 = vxor.u32 %v1186, 2147483648
        %v1250 = vxor.u32 %v1190, 2147483648
        %v1251 = vxor.u32 %v1192, 2147483648
        %v1252 = vxor.u32 %v1194, 2147483648
        %v1253 = vxor.u32 %v1196, 2147483648
        %v1254 = vxor.u32 %v1200, 2147483648
        %v1255 = vxor.u32 %v1202, 2147483648
        %v1256 = vxor.u32 %v1204, 2147483648
        %v1257 = vxor.u32 %v1206, 2147483648
        %v1258 = vxor.u32 %v1210, 2147483648
        %v1259 = vxor.u32 %v1212, 2147483648
        %v1260 = vxor.u32 %v1214, 2147483648
        %v1261 = vxor.u32 %v1216, 2147483648
        %v1262 = vxor.u32 %v1220, 2147483648
        %v1263 = vxor.u32 %v1222, 2147483648
        %v1264 = vxor.u32 %v1224, 2147483648
        %v1265 = vxor.u32 %v1226, 2147483648
        %v1266 = vxor.u32 %v1230, 2147483648
        %v1267 = vxor.u32 %v1232, 2147483648
        %v1268 = vxor.u32 %v1234, 2147483648
        %v1269 = vxor.u32 %v1236, 2147483648
        %v1270 = vmul.f32 %v1238, 1.442695
        %v1271 = vpow.pop %v1270
        %v1272 = vmul.f32 %v1239, 1.442695
        %v1273 = vpow.pop %v1272
        %v1274 = vmul.f32 %v1240, 1.442695
        %v1275 = vpow.pop %v1274
        %v1276 = vmul.f32 %v1241, 1.442695
        %v1277 = vpow.pop %v1276
        %v1278 = vmul.f32 %v1242, 1.442695
        %v1279 = vpow.pop %v1278
        %v1280 = vmul.f32 %v1243, 1.442695
        %v1281 = vpow.pop %v1280
        %v1282 = vmul.f32 %v1244, 1.442695
        %v1283 = vpow.pop %v1282
        %v1284 = vmul.f32 %v1245, 1.442695
        %v1285 = vpow.pop %v1284
        %v1286 = vmul.f32 %v1246, 1.442695
        %v1287 = vpow.pop %v1286
        %v1288 = vmul.f32 %v1247, 1.442695
        %v1289 = vpow.pop %v1288
        %v1290 = vmul.f32 %v1248, 1.442695
        %v1291 = vpow.pop %v1290
        %v1292 = vmul.f32 %v1249, 1.442695
        %v1293 = vpow.pop %v1292
        %v1294 = vmul.f32 %v1250, 1.442695
        %v1295 = vpow.pop %v1294
        %v1296 = vmul.f32 %v1251, 1.442695
        %v1297 = vpow.pop %v1296
        %v1298 = vmul.f32 %v1252, 1.442695
        %v1299 = vpow.pop %v1298
        %v1300 = vmul.f32 %v1253, 1.442695
        %v1301 = vpow.pop %v1300
        %v1302 = vmul.f32 %v1254, 1.442695
        %v1303 = vpow.pop %v1302
        %v1304 = vmul.f32 %v1255, 1.442695
        %v1305 = vpow.pop %v1304
        %v1306 = vmul.f32 %v1256, 1.442695
        %v1307 = vpow.pop %v1306
        %v1308 = vmul.f32 %v1257, 1.442695
        %v1309 = vpow.pop %v1308
        %v1310 = vmul.f32 %v1258, 1.442695
        %v1311 = vpow.pop %v1310
        %v1312 = vmul.f32 %v1259, 1.442695
        %v1313 = vpow.pop %v1312
        %v1314 = vmul.f32 %v1260, 1.442695
        %v1315 = vpow.pop %v1314
        %v1316 = vmul.f32 %v1261, 1.442695
        %v1317 = vpow.pop %v1316
        %v1318 = vmul.f32 %v1262, 1.442695
        %v1319 = vpow.pop %v1318
        %v1320 = vmul.f32 %v1263, 1.442695
        %v1321 = vpow.pop %v1320
        %v1322 = vmul.f32 %v1264, 1.442695
        %v1323 = vpow.pop %v1322
        %v1324 = vmul.f32 %v1265, 1.442695
        %v1325 = vpow.pop %v1324
        %v1326 = vmul.f32 %v1266, 1.442695
        %v1327 = vpow.pop %v1326
        %v1328 = vmul.f32 %v1267, 1.442695
        %v1329 = vpow.pop %v1328
        %v1330 = vmul.f32 %v1268, 1.442695
        %v1331 = vpow.pop %v1330
        %v1332 = vmul.f32 %v1269, 1.442695
        %v1333 = vpow.pop %v1332
        %v1334 = vadd.f32 %v1271, 1.0
        %v1335 = vadd.f32 %v1273, 1.0
        %v1336 = vadd.f32 %v1275, 1.0
        %v1337 = vadd.f32 %v1277, 1.0
        %v1338 = vadd.f32 %v1279, 1.0
        %v1339 = vadd.f32 %v1281, 1.0
        %v1340 = vadd.f32 %v1283, 1.0
        %v1341 = vadd.f32 %v1285, 1.0
        %v1342 = vadd.f32 %v1287, 1.0
        %v1343 = vadd.f32 %v1289, 1.0
        %v1344 = vadd.f32 %v1291, 1.0
        %v1345 = vadd.f32 %v1293, 1.0
        %v1346 = vadd.f32 %v1295, 1.0
        %v1347 = vadd.f32 %v1297, 1.0
        %v1348 = vadd.f32 %v1299, 1.0
        %v1349 = vadd.f32 %v1301, 1.0
        %v1350 = vadd.f32 %v1303, 1.0
        %v1351 = vadd.f32 %v1305, 1.0
        %v1352 = vadd.f32 %v1307, 1.0
        %v1353 = vadd.f32 %v1309, 1.0
        %v1354 = vadd.f32 %v1311, 1.0
        %v1355 = vadd.f32 %v1313, 1.0
        %v1356 = vadd.f32 %v1315, 1.0
        %v1357 = vadd.f32 %v1317, 1.0
        %v1358 = vadd.f32 %v1319, 1.0
        %v1359 = vadd.f32 %v1321, 1.0
        %v1360 = vadd.f32 %v1323, 1.0
        %v1361 = vadd.f32 %v1325, 1.0
        %v1362 = vadd.f32 %v1327, 1.0
        %v1363 = vadd.f32 %v1329, 1.0
        %v1364 = vadd.f32 %v1331, 1.0
        %v1365 = vadd.f32 %v1333, 1.0
        %v1366 = vrcp.pop %v1334
        %v1367 = vmul.f32 1.0, %v1366
        %v1368 = vrcp.pop %v1335
        %v1369 = vmul.f32 1.0, %v1368
        %v1370 = vrcp.pop %v1336
        %v1371 = vmul.f32 1.0, %v1370
        %v1372 = vrcp.pop %v1337
        %v1373 = vmul.f32 1.0, %v1372
        %v1374 = vrcp.pop %v1338
        %v1375 = vmul.f32 1.0, %v1374
        %v1376 = vrcp.pop %v1339
        %v1377 = vmul.f32 1.0, %v1376
        %v1378 = vrcp.pop %v1340
        %v1379 = vmul.f32 1.0, %v1378
        %v1380 = vrcp.pop %v1341
        %v1381 = vmul.f32 1.0, %v1380
        %v1382 = vrcp.pop %v1342
        %v1383 = vmul.f32 1.0, %v1382
        %v1384 = vrcp.pop %v1343
        %v1385 = vmul.f32 1.0, %v1384
        %v1386 = vrcp.pop %v1344
        %v1387 = vmul.f32 1.0, %v1386
        %v1388 = vrcp.pop %v1345
        %v1389 = vmul.f32 1.0, %v1388
        %v1390 = vrcp.pop %v1346
        %v1391 = vmul.f32 1.0, %v1390
        %v1392 = vrcp.pop %v1347
        %v1393 = vmul.f32 1.0, %v1392
        %v1394 = vrcp.pop %v1348
        %v1395 = vmul.f32 1.0, %v1394
        %v1396 = vrcp.pop %v1349
        %v1397 = vmul.f32 1.0, %v1396
        %v1398 = vrcp.pop %v1350
        %v1399 = vmul.f32 1.0, %v1398
        %v1400 = vrcp.pop %v1351
        %v1401 = vmul.f32 1.0, %v1400
        %v1402 = vrcp.pop %v1352
        %v1403 = vmul.f32 1.0, %v1402
        %v1404 = vrcp.pop %v1353
        %v1405 = vmul.f32 1.0, %v1404
        %v1406 = vrcp.pop %v1354
        %v1407 = vmul.f32 1.0, %v1406
        %v1408 = vrcp.pop %v1355
        %v1409 = vmul.f32 1.0, %v1408
        %v1410 = vrcp.pop %v1356
        %v1411 = vmul.f32 1.0, %v1410
        %v1412 = vrcp.pop %v1357
        %v1413 = vmul.f32 1.0, %v1412
        %v1414 = vrcp.pop %v1358
        %v1415 = vmul.f32 1.0, %v1414
        %v1416 = vrcp.pop %v1359
        %v1417 = vmul.f32 1.0, %v1416
        %v1418 = vrcp.pop %v1360
        %v1419 = vmul.f32 1.0, %v1418
        %v1420 = vrcp.pop %v1361
        %v1421 = vmul.f32 1.0, %v1420
        %v1422 = vrcp.pop %v1362
        %v1423 = vmul.f32 1.0, %v1422
        %v1424 = vrcp.pop %v1363
        %v1425 = vmul.f32 1.0, %v1424
        %v1426 = vrcp.pop %v1364
        %v1427 = vmul.f32 1.0, %v1426
        %v1428 = vrcp.pop %v1365
        %v1429 = vmul.f32 1.0, %v1428
        %v1430 = vld [vmem:[#allocation11] sm:$0xf]
        %v1431 = vld [vmem:[#allocation11 + $0x4] sm:$0xf]
        %v1432 = vld [vmem:[#allocation11 + $0x8] sm:$0xf]
        %v1433 = vld [vmem:[#allocation11 + $0xc] sm:$0xf]
        %v1434 = vld [vmem:[#allocation11 + $0x10] sm:$0xf]
        %v1435 = vld [vmem:[#allocation11 + $0x14] sm:$0xf]
        %v1436 = vld [vmem:[#allocation11 + $0x18] sm:$0xf]
        %v1437 = vld [vmem:[#allocation11 + $0x1c] sm:$0xf]
        %v1438 = vld [vmem:[#allocation11 + $0x20] sm:$0xf]
        %v1439 = vld [vmem:[#allocation11 + $0x24] sm:$0xf]
        %v1440 = vld [vmem:[#allocation11 + $0x28] sm:$0xf]
        %v1441 = vld [vmem:[#allocation11 + $0x2c] sm:$0xf]
        %v1442 = vld [vmem:[#allocation11 + $0x30] sm:$0xf]
        %v1443 = vld [vmem:[#allocation11 + $0x34] sm:$0xf]
        %v1444 = vld [vmem:[#allocation11 + $0x38] sm:$0xf]
        %v1445 = vld [vmem:[#allocation11 + $0x3c] sm:$0xf]
        %v1446 = vld [vmem:[#allocation13] sm:$0xf]
        %v1447 = vld [vmem:[#allocation13 + $0x4] sm:$0xf]
        %v1448 = vld [vmem:[#allocation13 + $0x8] sm:$0xf]
        %v1449 = vld [vmem:[#allocation13 + $0xc] sm:$0xf]
        %v1450 = vld [vmem:[#allocation13 + $0x10] sm:$0xf]
        %v1451 = vld [vmem:[#allocation13 + $0x14] sm:$0xf]
        %v1452 = vld [vmem:[#allocation13 + $0x18] sm:$0xf]
        %v1453 = vld [vmem:[#allocation13 + $0x1c] sm:$0xf]
        %v1454 = vld [vmem:[#allocation13 + $0x20] sm:$0xf]
        %v1455 = vld [vmem:[#allocation13 + $0x24] sm:$0xf]
        %v1456 = vld [vmem:[#allocation13 + $0x28] sm:$0xf]
        %v1457 = vld [vmem:[#allocation13 + $0x2c] sm:$0xf]
        %v1458 = vld [vmem:[#allocation13 + $0x30] sm:$0xf]
        %v1459 = vld [vmem:[#allocation13 + $0x34] sm:$0xf]
        %v1460 = vld [vmem:[#allocation13 + $0x38] sm:$0xf]
        %v1461 = vld [vmem:[#allocation13 + $0x3c] sm:$0xf]
        %v1462 = vld [vmem:[%s7] sm:$0x1]
        %v1464 = vlaneseq
        %v1465 = vshrl.u32 %v1464, 7
        %v1466 = vsub.s32 0, %v1465
        %v1467 = vrot.slane %v1462, %v1466
        %v1485 = vunpack.c.l.b16 %v1430
        %v1486 = vunpack.c.l.b16 %v1431
        %v1487 = vunpack.c.l.b16 %v1432
        %v1488 = vunpack.c.l.b16 %v1433
        %v1489 = vunpack.c.l.b16 %v1434
        %v1490 = vunpack.c.l.b16 %v1435
        %v1491 = vunpack.c.l.b16 %v1436
        %v1492 = vunpack.c.l.b16 %v1437
        %v1493 = vunpack.c.l.b16 %v1438
        %v1494 = vunpack.c.l.b16 %v1439
        %v1495 = vunpack.c.l.b16 %v1440
        %v1496 = vunpack.c.l.b16 %v1441
        %v1497 = vunpack.c.l.b16 %v1442
        %v1498 = vunpack.c.l.b16 %v1443
        %v1499 = vunpack.c.l.b16 %v1444
        %v1500 = vunpack.c.l.b16 %v1445
        %v1501 = vpack.c.b16 %v1486, %v1485
        %v1502 = vpack.c.b16 %v1488, %v1487
        %v1503 = vpack.c.b16 %v1490, %v1489
        %v1504 = vpack.c.b16 %v1492, %v1491
        %v1505 = vpack.c.b16 %v1494, %v1493
        %v1506 = vpack.c.b16 %v1496, %v1495
        %v1507 = vpack.c.b16 %v1498, %v1497
        %v1508 = vpack.c.b16 %v1500, %v1499
        %1517 = vmatprep.subr.bf16.mxu0 0
        %1518 = vmatpush1.bf16.msra.mxu0 %v1501
        %1519 = vmatprep.subr.bf16.mxu0 0
        %1520 = vmatpush1.bf16.msra.mxu0 %v1502
        %1521 = vmatprep.subr.bf16.mxu0 0
        %1522 = vmatpush1.bf16.msra.mxu0 %v1503
        %1523 = vmatprep.subr.bf16.mxu0 0
        %1524 = vmatpush1.bf16.msra.mxu0 %v1504
        %1525 = vmatprep.subr.bf16.mxu0 0
        %1526 = vmatpush1.bf16.msra.mxu0 %v1505
        %1527 = vmatprep.subr.bf16.mxu0 0
        %1528 = vmatpush1.bf16.msra.mxu0 %v1506
        %1529 = vmatprep.subr.bf16.mxu0 0
        %1530 = vmatpush1.bf16.msra.mxu0 %v1507
        %1531 = vmatprep.subr.bf16.mxu0 0
        %1532 = vmatpush1.bf16.msra.mxu0 %v1508
        %1533 = vmatprep.subr.bf16.mxu0 0
        %1534 = vmatpush1.bf16.msra.mxu0 0
        %1535 = vmatprep.subr.bf16.mxu0 0
        %1536 = vmatpush1.bf16.msra.mxu0 0
        %1537 = vmatprep.subr.bf16.mxu0 0
        %1538 = vmatpush1.bf16.msra.mxu0 0
        %1539 = vmatprep.subr.bf16.mxu0 0
        %1540 = vmatpush1.bf16.msra.mxu0 0
        %1541 = vmatprep.subr.bf16.mxu0 0
        %1542 = vmatpush1.bf16.msra.mxu0 0
        %1543 = vmatprep.subr.bf16.mxu0 0
        %1544 = vmatpush1.bf16.msra.mxu0 0
        %1545 = vmatprep.subr.bf16.mxu0 0
        %1546 = vmatpush1.bf16.msra.mxu0 0
        %1547 = vmatprep.subr.bf16.mxu0 0
        %1548 = vmatpush1.bf16.msra.mxu0 0
        %1549 = vmatprep.mubr.bf16.mxu0 0
        %1550 = vmatmul.mubr.bf16.gmra.mrb[0].mxu0 %v913
        %v1551 = vpop.f32.mrb[0].mxu0
        %v1552 = vadd.f32 %v1467, %v1551
        %v1553 = vpop.f32.mrb[0].mxu0
        %v1554 = vpop.f32.mrb[0].mxu0
        %v1555 = vadd.f32 %v1467, %v1554
        %v1556 = vpop.f32.mrb[0].mxu0
        %1557 = vmatprep.mubr.bf16.mxu0 0
        %1558 = vmatmul.mubr.bf16.gmra.mrb[0].mxu0 %v914
        %v1559 = vpop.f32.mrb[0].mxu0
        %v1560 = vadd.f32 %v1467, %v1559
        %v1561 = vpop.f32.mrb[0].mxu0
        %v1562 = vpop.f32.mrb[0].mxu0
        %v1563 = vadd.f32 %v1467, %v1562
        %v1564 = vpop.f32.mrb[0].mxu0
        %1565 = vmatprep.mubr.bf16.mxu0 0
        %1566 = vmatmul.mubr.bf16.gmra.mrb[0].mxu0 %v915
        %v1567 = vpop.f32.mrb[0].mxu0
        %v1568 = vadd.f32 %v1467, %v1567
        %v1569 = vpop.f32.mrb[0].mxu0
        %v1570 = vpop.f32.mrb[0].mxu0
        %v1571 = vadd.f32 %v1467, %v1570
        %v1572 = vpop.f32.mrb[0].mxu0
        %1573 = vmatprep.mubr.bf16.mxu0 0
        %1574 = vmatmul.mubr.bf16.gmra.mrb[0].mxu0 %v916
        %v1575 = vpop.f32.mrb[0].mxu0
        %v1576 = vadd.f32 %v1467, %v1575
        %v1577 = vpop.f32.mrb[0].mxu0
        %v1578 = vpop.f32.mrb[0].mxu0
        %v1579 = vadd.f32 %v1467, %v1578
        %v1580 = vpop.f32.mrb[0].mxu0
        %1581 = vmatprep.mubr.bf16.mxu0 0
        %1582 = vmatmul.mubr.bf16.gmra.mrb[0].mxu0 %v917
        %v1583 = vpop.f32.mrb[0].mxu0
        %v1584 = vadd.f32 %v1467, %v1583
        %v1585 = vpop.f32.mrb[0].mxu0
        %v1586 = vpop.f32.mrb[0].mxu0
        %v1587 = vadd.f32 %v1467, %v1586
        %v1588 = vpop.f32.mrb[0].mxu0
        %1589 = vmatprep.mubr.bf16.mxu0 0
        %1590 = vmatmul.mubr.bf16.gmra.mrb[0].mxu0 %v918
        %v1591 = vpop.f32.mrb[0].mxu0
        %v1592 = vadd.f32 %v1467, %v1591
        %v1593 = vpop.f32.mrb[0].mxu0
        %v1594 = vpop.f32.mrb[0].mxu0
        %v1595 = vadd.f32 %v1467, %v1594
        %v1596 = vpop.f32.mrb[0].mxu0
        %1597 = vmatprep.mubr.bf16.mxu0 0
        %1598 = vmatmul.mubr.bf16.gmra.mrb[0].mxu0 %v919
        %v1599 = vpop.f32.mrb[0].mxu0
        %v1600 = vadd.f32 %v1467, %v1599
        %v1601 = vpop.f32.mrb[0].mxu0
        %v1602 = vpop.f32.mrb[0].mxu0
        %v1603 = vadd.f32 %v1467, %v1602
        %v1604 = vpop.f32.mrb[0].mxu0
        %1605 = vmatprep.mubr.bf16.mxu0 0
        %1606 = vmatmul.mubr.bf16.gmra.mrb[0].mxu0 %v920
        %v1607 = vpop.f32.mrb[0].mxu0
        %v1608 = vadd.f32 %v1467, %v1607
        %v1609 = vpop.f32.mrb[0].mxu0
        %v1610 = vpop.f32.mrb[0].mxu0
        %v1611 = vadd.f32 %v1467, %v1610
        %v1612 = vpop.f32.mrb[0].mxu0
        %1613 = vdwg.mxu0
        %v1614 = vld [vmem:[%s8] sm:$0x1]
        %v1616 = vlaneseq
        %v1617 = vshrl.u32 %v1616, 7
        %v1618 = vsub.s32 0, %v1617
        %v1619 = vrot.slane %v1614, %v1618
        %v1637 = vunpack.c.l.b16 %v1446
        %v1638 = vunpack.c.l.b16 %v1447
        %v1639 = vunpack.c.l.b16 %v1448
        %v1640 = vunpack.c.l.b16 %v1449
        %v1641 = vunpack.c.l.b16 %v1450
        %v1642 = vunpack.c.l.b16 %v1451
        %v1643 = vunpack.c.l.b16 %v1452
        %v1644 = vunpack.c.l.b16 %v1453
        %v1645 = vunpack.c.l.b16 %v1454
        %v1646 = vunpack.c.l.b16 %v1455
        %v1647 = vunpack.c.l.b16 %v1456
        %v1648 = vunpack.c.l.b16 %v1457
        %v1649 = vunpack.c.l.b16 %v1458
        %v1650 = vunpack.c.l.b16 %v1459
        %v1651 = vunpack.c.l.b16 %v1460
        %v1652 = vunpack.c.l.b16 %v1461
        %v1653 = vpack.c.b16 %v1638, %v1637
        %v1654 = vpack.c.b16 %v1640, %v1639
        %v1655 = vpack.c.b16 %v1642, %v1641
        %v1656 = vpack.c.b16 %v1644, %v1643
        %v1657 = vpack.c.b16 %v1646, %v1645
        %v1658 = vpack.c.b16 %v1648, %v1647
        %v1659 = vpack.c.b16 %v1650, %v1649
        %v1660 = vpack.c.b16 %v1652, %v1651
        %1669 = vmatprep.subr.bf16.mxu0 0
        %1670 = vmatpush1.bf16.msra.mxu0 %v1653
        %1671 = vmatprep.subr.bf16.mxu0 0
        %1672 = vmatpush1.bf16.msra.mxu0 %v1654
        %1673 = vmatprep.subr.bf16.mxu0 0
        %1674 = vmatpush1.bf16.msra.mxu0 %v1655
        %1675 = vmatprep.subr.bf16.mxu0 0
        %1676 = vmatpush1.bf16.msra.mxu0 %v1656
        %1677 = vmatprep.subr.bf16.mxu0 0
        %1678 = vmatpush1.bf16.msra.mxu0 %v1657
        %1679 = vmatprep.subr.bf16.mxu0 0
        %1680 = vmatpush1.bf16.msra.mxu0 %v1658
        %1681 = vmatprep.subr.bf16.mxu0 0
        %1682 = vmatpush1.bf16.msra.mxu0 %v1659
        %1683 = vmatprep.subr.bf16.mxu0 0
        %1684 = vmatpush1.bf16.msra.mxu0 %v1660
        %1685 = vmatprep.subr.bf16.mxu0 0
        %1686 = vmatpush1.bf16.msra.mxu0 0
        %1687 = vmatprep.subr.bf16.mxu0 0
        %1688 = vmatpush1.bf16.msra.mxu0 0
        %1689 = vmatprep.subr.bf16.mxu0 0
        %1690 = vmatpush1.bf16.msra.mxu0 0
        %1691 = vmatprep.subr.bf16.mxu0 0
        %1692 = vmatpush1.bf16.msra.mxu0 0
        %1693 = vmatprep.subr.bf16.mxu0 0
        %1694 = vmatpush1.bf16.msra.mxu0 0
        %1695 = vmatprep.subr.bf16.mxu0 0
        %1696 = vmatpush1.bf16.msra.mxu0 0
        %1697 = vmatprep.subr.bf16.mxu0 0
        %1698 = vmatpush1.bf16.msra.mxu0 0
        %1699 = vmatprep.subr.bf16.mxu0 0
        %1700 = vmatpush1.bf16.msra.mxu0 0
        %1701 = vmatprep.mubr.bf16.mxu0 0
        %1702 = vmatmul.mubr.bf16.gmra.mrb[0].mxu0 %v736
        %v1703 = vpop.f32.mrb[0].mxu0
        %v1704 = vadd.f32 %v1619, %v1703
        %v1705 = vpop.f32.mrb[0].mxu0
        %v1706 = vpop.f32.mrb[0].mxu0
        %v1707 = vadd.f32 %v1619, %v1706
        %v1708 = vpop.f32.mrb[0].mxu0
        %1709 = vmatprep.mubr.bf16.mxu0 0
        %1710 = vmatmul.mubr.bf16.gmra.mrb[0].mxu0 %v737
        %v1711 = vpop.f32.mrb[0].mxu0
        %v1712 = vadd.f32 %v1619, %v1711
        %v1713 = vpop.f32.mrb[0].mxu0
        %v1714 = vpop.f32.mrb[0].mxu0
        %v1715 = vadd.f32 %v1619, %v1714
        %v1716 = vpop.f32.mrb[0].mxu0
        %1717 = vmatprep.mubr.bf16.mxu0 0
        %1718 = vmatmul.mubr.bf16.gmra.mrb[0].mxu0 %v738
        %v1719 = vpop.f32.mrb[0].mxu0
        %v1720 = vadd.f32 %v1619, %v1719
        %v1721 = vpop.f32.mrb[0].mxu0
        %v1722 = vpop.f32.mrb[0].mxu0
        %v1723 = vadd.f32 %v1619, %v1722
        %v1724 = vpop.f32.mrb[0].mxu0
        %1725 = vmatprep.mubr.bf16.mxu0 0
        %1726 = vmatmul.mubr.bf16.gmra.mrb[0].mxu0 %v739
        %v1727 = vpop.f32.mrb[0].mxu0
        %v1728 = vadd.f32 %v1619, %v1727
        %v1729 = vpop.f32.mrb[0].mxu0
        %v1730 = vpop.f32.mrb[0].mxu0
        %v1731 = vadd.f32 %v1619, %v1730
        %v1732 = vpop.f32.mrb[0].mxu0
        %1733 = vmatprep.mubr.bf16.mxu0 0
        %1734 = vmatmul.mubr.bf16.gmra.mrb[0].mxu0 %v740
        %v1735 = vpop.f32.mrb[0].mxu0
        %v1736 = vadd.f32 %v1619, %v1735
        %v1737 = vpop.f32.mrb[0].mxu0
        %v1738 = vpop.f32.mrb[0].mxu0
        %v1739 = vadd.f32 %v1619, %v1738
        %v1740 = vpop.f32.mrb[0].mxu0
        %1741 = vmatprep.mubr.bf16.mxu0 0
        %1742 = vmatmul.mubr.bf16.gmra.mrb[0].mxu0 %v741
        %v1743 = vpop.f32.mrb[0].mxu0
        %v1744 = vadd.f32 %v1619, %v1743
        %v1745 = vpop.f32.mrb[0].mxu0
        %v1746 = vpop.f32.mrb[0].mxu0
        %v1747 = vadd.f32 %v1619, %v1746
        %v1748 = vpop.f32.mrb[0].mxu0
        %1749 = vmatprep.mubr.bf16.mxu0 0
        %1750 = vmatmul.mubr.bf16.gmra.mrb[0].mxu0 %v742
        %v1751 = vpop.f32.mrb[0].mxu0
        %v1752 = vadd.f32 %v1619, %v1751
        %v1753 = vpop.f32.mrb[0].mxu0
        %v1754 = vpop.f32.mrb[0].mxu0
        %v1755 = vadd.f32 %v1619, %v1754
        %v1756 = vpop.f32.mrb[0].mxu0
        %1757 = vmatprep.mubr.bf16.mxu0 0
        %1758 = vmatmul.mubr.bf16.gmra.mrb[0].mxu0 %v743
        %v1759 = vpop.f32.mrb[0].mxu0
        %v1760 = vadd.f32 %v1619, %v1759
        %v1761 = vpop.f32.mrb[0].mxu0
        %v1762 = vpop.f32.mrb[0].mxu0
        %v1763 = vadd.f32 %v1619, %v1762
        %v1764 = vpop.f32.mrb[0].mxu0
        %1765 = vdwg.mxu0
        %v1766 = vmul.f32 %v1367, %v1704
        %v1767 = vmul.f32 %v1371, %v1707
        %v1768 = vmul.f32 %v1375, %v1712
        %v1769 = vmul.f32 %v1379, %v1715
        %v1770 = vmul.f32 %v1383, %v1720
        %v1771 = vmul.f32 %v1387, %v1723
        %v1772 = vmul.f32 %v1391, %v1728
        %v1773 = vmul.f32 %v1395, %v1731
        %v1774 = vmul.f32 %v1399, %v1736
        %v1775 = vmul.f32 %v1403, %v1739
        %v1776 = vmul.f32 %v1407, %v1744
        %v1777 = vmul.f32 %v1411, %v1747
        %v1778 = vmul.f32 %v1415, %v1752
        %v1779 = vmul.f32 %v1419, %v1755
        %v1780 = vmul.f32 %v1423, %v1760
        %v1781 = vmul.f32 %v1427, %v1763
        %v1782 = vadd.f32 %v1552, %v1766
        %v1783 = vadd.f32 %v1555, %v1767
        %v1784 = vadd.f32 %v1560, %v1768
        %v1785 = vadd.f32 %v1563, %v1769
        %v1786 = vadd.f32 %v1568, %v1770
        %v1787 = vadd.f32 %v1571, %v1771
        %v1788 = vadd.f32 %v1576, %v1772
        %v1789 = vadd.f32 %v1579, %v1773
        %v1790 = vadd.f32 %v1584, %v1774
        %v1791 = vadd.f32 %v1587, %v1775
        %v1792 = vadd.f32 %v1592, %v1776
        %v1793 = vadd.f32 %v1595, %v1777
        %v1794 = vadd.f32 %v1600, %v1778
        %v1795 = vadd.f32 %v1603, %v1779
        %v1796 = vadd.f32 %v1608, %v1780
        %v1797 = vadd.f32 %v1611, %v1781
        %v1798 = vtanh.pop %v1782
        %v1799 = vtanh.pop %v1783
        %v1800 = vtanh.pop %v1784
        %v1801 = vtanh.pop %v1785
        %v1802 = vtanh.pop %v1786
        %v1803 = vtanh.pop %v1787
        %v1804 = vtanh.pop %v1788
        %v1805 = vtanh.pop %v1789
        %v1806 = vtanh.pop %v1790
        %v1807 = vtanh.pop %v1791
        %v1808 = vtanh.pop %v1792
        %v1809 = vtanh.pop %v1793
        %v1810 = vtanh.pop %v1794
        %v1811 = vtanh.pop %v1795
        %v1812 = vtanh.pop %v1796
        %v1813 = vtanh.pop %v1797
        %v1814 = vsub.f32 1.0, %v1369
        %v1815 = vsub.f32 1.0, %v1373
        %v1816 = vsub.f32 1.0, %v1377
        %v1817 = vsub.f32 1.0, %v1381
        %v1818 = vsub.f32 1.0, %v1385
        %v1819 = vsub.f32 1.0, %v1389
        %v1820 = vsub.f32 1.0, %v1393
        %v1821 = vsub.f32 1.0, %v1397
        %v1822 = vsub.f32 1.0, %v1401
        %v1823 = vsub.f32 1.0, %v1405
        %v1824 = vsub.f32 1.0, %v1409
        %v1825 = vsub.f32 1.0, %v1413
        %v1826 = vsub.f32 1.0, %v1417
        %v1827 = vsub.f32 1.0, %v1421
        %v1828 = vsub.f32 1.0, %v1425
        %v1829 = vsub.f32 1.0, %v1429
        %v1830 = vmul.f32 %v1814, %v1798
        %v1831 = vmul.f32 %v1815, %v1799
        %v1832 = vmul.f32 %v1816, %v1800
        %v1833 = vmul.f32 %v1817, %v1801
        %v1834 = vmul.f32 %v1818, %v1802
        %v1835 = vmul.f32 %v1819, %v1803
        %v1836 = vmul.f32 %v1820, %v1804
        %v1837 = vmul.f32 %v1821, %v1805
        %v1838 = vmul.f32 %v1822, %v1806
        %v1839 = vmul.f32 %v1823, %v1807
        %v1840 = vmul.f32 %v1824, %v1808
        %v1841 = vmul.f32 %v1825, %v1809
        %v1842 = vmul.f32 %v1826, %v1810
        %v1843 = vmul.f32 %v1827, %v1811
        %v1844 = vmul.f32 %v1828, %v1812
        %v1845 = vmul.f32 %v1829, %v1813
        %v1846 = vmul.f32 %v1369, %v720
        %v1847 = vmul.f32 %v1373, %v721
        %v1848 = vmul.f32 %v1377, %v722
        %v1849 = vmul.f32 %v1381, %v723
        %v1850 = vmul.f32 %v1385, %v724
        %v1851 = vmul.f32 %v1389, %v725
        %v1852 = vmul.f32 %v1393, %v726
        %v1853 = vmul.f32 %v1397, %v727
        %v1854 = vmul.f32 %v1401, %v728
        %v1855 = vmul.f32 %v1405, %v729
        %v1856 = vmul.f32 %v1409, %v730
        %v1857 = vmul.f32 %v1413, %v731
        %v1858 = vmul.f32 %v1417, %v732
        %v1859 = vmul.f32 %v1421, %v733
        %v1860 = vmul.f32 %v1425, %v734
        %v1861 = vmul.f32 %v1429, %v735
        %v1862 = vadd.f32 %v1830, %v1846
        %v1863 = vadd.f32 %v1831, %v1847
        %v1864 = vadd.f32 %v1832, %v1848
        %v1865 = vadd.f32 %v1833, %v1849
        %v1866 = vadd.f32 %v1834, %v1850
        %v1867 = vadd.f32 %v1835, %v1851
        %v1868 = vadd.f32 %v1836, %v1852
        %v1869 = vadd.f32 %v1837, %v1853
        %v1870 = vadd.f32 %v1838, %v1854
        %v1871 = vadd.f32 %v1839, %v1855
        %v1872 = vadd.f32 %v1840, %v1856
        %v1873 = vadd.f32 %v1841, %v1857
        %v1874 = vadd.f32 %v1842, %v1858
        %v1875 = vadd.f32 %v1843, %v1859
        %v1876 = vadd.f32 %v1844, %v1860
        %v1877 = vadd.f32 %v1845, %v1861
        %1878 = vst [vmem:[%s719] sm:$0xff] %v1862
        %1879 = vst [vmem:[%s719 + $0x8] sm:$0xff] %v1863
        %1880 = vst [vmem:[%s719 + $0x10] sm:$0xff] %v1864
        %1881 = vst [vmem:[%s719 + $0x18] sm:$0xff] %v1865
        %1882 = vst [vmem:[%s719 + $0x20] sm:$0xff] %v1866
        %1883 = vst [vmem:[%s719 + $0x28] sm:$0xff] %v1867
        %1884 = vst [vmem:[%s719 + $0x30] sm:$0xff] %v1868
        %1885 = vst [vmem:[%s719 + $0x38] sm:$0xff] %v1869
        %1886 = vst [vmem:[%s719 + $0x40] sm:$0xff] %v1870
        %1887 = vst [vmem:[%s719 + $0x48] sm:$0xff] %v1871
        %1888 = vst [vmem:[%s719 + $0x50] sm:$0xff] %v1872
        %1889 = vst [vmem:[%s719 + $0x58] sm:$0xff] %v1873
        %1890 = vst [vmem:[%s719 + $0x60] sm:$0xff] %v1874
        %1891 = vst [vmem:[%s719 + $0x68] sm:$0xff] %v1875
        %1892 = vst [vmem:[%s719 + $0x70] sm:$0xff] %v1876
        %1893 = vst [vmem:[%s719 + $0x78] sm:$0xff] %v1877
        %p1894 = scmp.eq.s32.totalorder %s29, 2
        // Predicated region
        $region93: #{tpu_custom_call.1} parent=59 // pred_check
          %p1895 = pneg %p1894
        $region94: #{tpu_custom_call.1} parent=59 // pred_check_branch
          %1897 = sbr.rel (%p1895) target = $region96
        $region95: #{tpu_custom_call.1} parent=59 // pred_region
          %v1898 = vmul.f32 %v1862, 0.01
          %v1899 = vmul.f32 %v1863, 0.01
          %v1900 = vmul.f32 %v1864, 0.01
          %v1901 = vmul.f32 %v1865, 0.01
          %v1902 = vmul.f32 %v1866, 0.01
          %v1903 = vmul.f32 %v1867, 0.01
          %v1904 = vmul.f32 %v1868, 0.01
          %v1905 = vmul.f32 %v1869, 0.01
          %v1906 = vmul.f32 %v1870, 0.01
          %v1907 = vmul.f32 %v1871, 0.01
          %v1908 = vmul.f32 %v1872, 0.01
          %v1909 = vmul.f32 %v1873, 0.01
          %v1910 = vmul.f32 %v1874, 0.01
          %v1911 = vmul.f32 %v1875, 0.01
          %v1912 = vmul.f32 %v1876, 0.01
          %v1913 = vmul.f32 %v1877, 0.01
          %v1914 = vmax.f32 %v1862, %v1898
          %v1915 = vmax.f32 %v1863, %v1899
          %v1916 = vmax.f32 %v1864, %v1900
          %v1917 = vmax.f32 %v1865, %v1901
          %v1918 = vmax.f32 %v1866, %v1902
          %v1919 = vmax.f32 %v1867, %v1903
          %v1920 = vmax.f32 %v1868, %v1904
          %v1921 = vmax.f32 %v1869, %v1905
          %v1922 = vmax.f32 %v1870, %v1906
          %v1923 = vmax.f32 %v1871, %v1907
          %v1924 = vmax.f32 %v1872, %v1908
          %v1925 = vmax.f32 %v1873, %v1909
          %v1926 = vmax.f32 %v1874, %v1910
          %v1927 = vmax.f32 %v1875, %v1911
          %v1928 = vmax.f32 %v1876, %v1912
          %v1929 = vmax.f32 %v1877, %v1913
          %v1930 = vpack.c.bf16 %v1915, %v1914
          %v1931 = vpack.c.bf16 %v1917, %v1916
          %v1932 = vpack.c.bf16 %v1919, %v1918
          %v1933 = vpack.c.bf16 %v1921, %v1920
          %v1934 = vpack.c.bf16 %v1923, %v1922
          %v1935 = vpack.c.bf16 %v1925, %v1924
          %v1936 = vpack.c.bf16 %v1927, %v1926
          %v1937 = vpack.c.bf16 %v1929, %v1928
          %v1938 = vld [vmem:[#allocation14] sm:$0xff]
          %v1939 = vld [vmem:[%s473] sm:$0xf]
          %1940 = vmatprep.subr.bf16.mxu0 0
          %1941 = vmatpush1.bf16.msra.mxu0 %v1930
          %1942 = vmatprep.subr.bf16.mxu0 0
          %1943 = vmatpush1.bf16.msra.mxu0 %v1931
          %1944 = vmatprep.subr.bf16.mxu0 0
          %1945 = vmatpush1.bf16.msra.mxu0 %v1932
          %1946 = vmatprep.subr.bf16.mxu0 0
          %1947 = vmatpush1.bf16.msra.mxu0 %v1933
          %1948 = vmatprep.subr.bf16.mxu0 0
          %1949 = vmatpush1.bf16.msra.mxu0 %v1934
          %1950 = vmatprep.subr.bf16.mxu0 0
          %1951 = vmatpush1.bf16.msra.mxu0 %v1935
          %1952 = vmatprep.subr.bf16.mxu0 0
          %1953 = vmatpush1.bf16.msra.mxu0 %v1936
          %1954 = vmatprep.subr.bf16.mxu0 0
          %1955 = vmatpush1.bf16.msra.mxu0 %v1937
          %1956 = vmatprep.subr.bf16.mxu0 0
          %1957 = vmatpush1.bf16.msra.mxu0 0
          %1958 = vmatprep.subr.bf16.mxu0 0
          %1959 = vmatpush1.bf16.msra.mxu0 0
          %1960 = vmatprep.subr.bf16.mxu0 0
          %1961 = vmatpush1.bf16.msra.mxu0 0
          %1962 = vmatprep.subr.bf16.mxu0 0
          %1963 = vmatpush1.bf16.msra.mxu0 0
          %1964 = vmatprep.subr.bf16.mxu0 0
          %1965 = vmatpush1.bf16.msra.mxu0 0
          %1966 = vmatprep.subr.bf16.mxu0 0
          %1967 = vmatpush1.bf16.msra.mxu0 0
          %1968 = vmatprep.subr.bf16.mxu0 0
          %1969 = vmatpush1.bf16.msra.mxu0 0
          %1970 = vmatprep.subr.bf16.mxu0 0
          %1971 = vmatpush1.bf16.msra.mxu0 0
          %1972 = vmatprep.mubr.bf16.mxu0 0
          %1973 = vmatmul.mubr.bf16.gmra.mrb[0].mxu0 %v1939
          %v1974 = vpop.f32.mrb[0].mxu0
          %v1975 = vadd.f32 0.0, %v1974
          %v1976 = vpop.f32.mrb[0].mxu0
          %v1977 = vpop.f32.mrb[0].mxu0
          %v1978 = vpop.f32.mrb[0].mxu0
          %1979 = vdwg.mxu0
          %v1980 = vadd.f32 %v1938, %v1975
          %1981 = vst [vmem:[#allocation14] sm:$0xff] %v1980
        $region96: #{tpu_custom_call.1} parent=59 // pred_fallthru
          _
        // Predicated region
        $region97: #{tpu_custom_call.1} parent=59 // pred_check
          %p1982 = pneg %p275
        $region98: #{tpu_custom_call.1} parent=59 // pred_check_branch
          %1984 = sbr.rel (%p1982) target = $region100
        $region99: #{tpu_custom_call.1} parent=59 // pred_region
          %s1986 = ssub.s32 128, 128
          %1987 = vsyncadd [#allocation6], %s1986
          %s1989 = sshll.u32 [#allocation14], 4
          %s1990 = int_to_ptr.vmem [resolvable:$true] %s1989
          %1992 = dma.vmem_to_hbm [thread:$0]  %s1990, 128, %s10, [#allocation6]
        $region100: #{tpu_custom_call.1} parent=59 // pred_fallthru
          _
        // Predicated region
        $region101: #{tpu_custom_call.1} parent=59 // pred_check
          %p1993 = pneg %p275
        $region102: #{tpu_custom_call.1} parent=59 // pred_check_branch
          %1995 = sbr.rel (%p1993) target = $region104
        $region103: #{tpu_custom_call.1} parent=59 // pred_region
          %1996 = dma.done [#allocation6], 128
        $region104: #{tpu_custom_call.1} parent=59 // pred_fallthru
          _
      $region60: #{tpu_custom_call.1} parent=5 // pred_fallthru
        _
      %p1997 = scmp.le.s32.totalorder 2, %s20
      // Predicated region
      $region105: #{tpu_custom_call.1} parent=5 // pred_check
        %p1998 = pneg %p1997
      $region106: #{tpu_custom_call.1} parent=5 // pred_check_branch
        %2000 = sbr.rel (%p1998) target = $region108
      $region107: #{tpu_custom_call.1} parent=5 // pred_region
        %s2001 = ssub.s32 %s20, 2
      $region108: #{tpu_custom_call.1} parent=5 // pred_fallthru
        _
    $region6: #{tpu_custom_call.1} parent=1 // loop_footer
      %s24 = sadd.s32 1, %s20
    $region7: #{tpu_custom_call.1} parent=1 // loop_footer_branch
      %19 = sbr.rel target = $region3
    $region8: #{tpu_custom_call.1} parent=1 // loop_exit
      _
    %2002 = vsyncpa [#allocation5], 1
    %s2003 = scalar_lea.sflag [#allocation5], 1
    %2004 = vsyncpa %s2003, 1
    %2005 = vsyncpa [#allocation8], 1
    %2006 = vsyncpa [#allocation12], 1
    %2007 = vsyncpa [#allocation6], 1
    %s2008 = scalar_lea.sflag [#allocation6], 1
    %2009 = vsyncpa %s2008, 1

</llo_original>
